<compile_context>
chip_gen: v5e
topology: v5e:2x2
jax: 0.10.0
libtpu: 0.0.40
codegen_flags: <defaults>
</compile_context>

<pallas_src>
import functools

import jax
import jax.numpy as jnp
from jax.experimental import pallas as pl
from jax.experimental.pallas import tpu as pltpu

T_REDUCE = 8
CLP_MAX = 2
THETA = float(CLP_MAX) - 0.001  # threshold used both in the modulo and in getSpikes


# ---------------------------------------------------------------------------
# Pallas kernel: conv-as-matmul (bf16 MXU, f32 acc) + bias + spike generation
# ---------------------------------------------------------------------------
def _repvgg_block_kernel(p_ref, w_ref, b_ref, o_ref, *, t_reduce, emit_train):
    # p_ref: (tm, K)      bf16 im2col patches of the T-averaged input
    # w_ref: (K, tn)      bf16 reshaped conv weight slab
    # b_ref: (1, tn)      f32 bias slab
    # o_ref: (T, tm, tn)  bf16 spike train        (emit_train=True,  last block)
    #        (tm, tn)     bf16 T-mean of spikes   (emit_train=False, inner blocks)
    y = jnp.dot(p_ref[...], w_ref[...], preferred_element_type=jnp.float32)
    y = y + b_ref[...]                                   # (tm, tn) f32

    theta = jnp.float32(THETA)
    inv_theta = jnp.float32(1.0 / THETA)

    def spike(i):
        # (i*y) mod theta  (positive divisor -> same as torch.remainder), divide-free
        iy = jnp.float32(i) * y
        m = iy - jnp.floor(iy * inv_theta) * theta
        return m + y >= theta                            # single-step IF, bool (tm, tn)

    if emit_train:
        for i in range(t_reduce):
            o_ref[i] = spike(i).astype(o_ref.dtype)      # lane-dense full-plane store
    else:
        acc = jnp.zeros_like(y)
        for i in range(t_reduce):
            acc = acc + spike(i).astype(jnp.float32)
        # mean of 0/1 spikes = k/8, exact in bf16
        o_ref[...] = (acc * jnp.float32(1.0 / t_reduce)).astype(o_ref.dtype)


# ---------------------------------------------------------------------------
# Glue: im2col patch extraction on the (already T-averaged) NHWC activation
# ---------------------------------------------------------------------------
def _extract_patches_nhwc(xm, stride):
    # xm: (N, H, W, C) -> (M, K) bf16 with M = N*Ho*Wo, K = 9*C ordered (kh*3+kw, c)
    N, H, W, C = xm.shape
    Ho = (H + 2 - 3) // stride + 1
    Wo = (W + 2 - 3) // stride + 1
    xp = jnp.pad(xm, ((0, 0), (1, 1), (1, 1), (0, 0)))
    slabs = []
    for kh in range(3):
        for kw in range(3):
            slabs.append(xp[:, kh:kh + (Ho - 1) * stride + 1:stride,
                             kw:kw + (Wo - 1) * stride + 1:stride, :])
    p = jnp.stack(slabs, axis=3)                          # (N, Ho, Wo, 9, C)
    return p.reshape(N * Ho * Wo, 9 * C).astype(jnp.bfloat16), Ho, Wo


def _round_up(x, m):
    return ((x + m - 1) // m) * m


def _choose_tiles(M, K, C_out, T):
    # Lane (C_out) tile: match the MXU / keep blocks lane-dense.
    if C_out % 256 == 0:
        tn = 256
    elif C_out % 128 == 0:
        tn = 128
    else:
        tn = C_out
    # Row tile: largest that fits a conservative VMEM budget (double-buffered bf16
    # input/output + weights + f32 work tiles). Budget chosen to fit v5e/v6e/v7x.
    budget = 20 * 1024 * 1024
    tm = 8
    for cand in (1024, 512, 256, 128, 64, 32, 16, 8):
        in_b = 2 * cand * K * 2                 # bf16 patches, double buffered
        out_b = 2 * T * cand * tn * 2           # bf16 spikes, double buffered
        w_b = 2 * (K * tn * 2 + tn * 4)         # weights + bias
        work = 4 * cand * tn * 4                # f32 y / temporaries
        if in_b + out_b + w_b + work <= budget:
            tm = cand
            break
    tm = min(tm, _round_up(M, 8))               # don't over-pad tiny problems
    return tm, tn


# ---------------------------------------------------------------------------
# One RepVGGplusBlock forward (deploy path), channels-last T-averaged input
# ---------------------------------------------------------------------------
def repvgg_block_forward(x_mean, weight, bias, stride, *, emit_train):
    # x_mean: (N, H, W, C_in) T-averaged activation (f32 or bf16)
    # weight: (C_out, C_in, 3, 3) ; bias: (C_out,)
    N, H, W, C_in = x_mean.shape
    C_out = weight.shape[0]
    T = T_REDUCE

    patches, Ho, Wo = _extract_patches_nhwc(x_mean, stride)       # (M, K) bf16
    M, K = patches.shape
    # weight -> (kh, kw, c_in) x C_out to match the patch K ordering
    w2d = jnp.transpose(weight, (2, 3, 1, 0)).reshape(K, C_out).astype(jnp.bfloat16)
    b2d = bias.reshape(1, C_out).astype(jnp.float32)

    tm, tn = _choose_tiles(M, K, C_out, T)
    Mp = _round_up(M, tm)
    if Mp != M:
        patches = jnp.pad(patches, ((0, Mp - M), (0, 0)))

    grid = (Mp // tm, C_out // tn)
    kernel = functools.partial(_repvgg_block_kernel, t_reduce=T, emit_train=emit_train)

    if emit_train:
        out_shape = jax.ShapeDtypeStruct((T, Mp, C_out), jnp.bfloat16)
        out_spec = pl.BlockSpec((T, tm, tn), lambda i, j: (0, i, j))
    else:
        out_shape = jax.ShapeDtypeStruct((Mp, C_out), jnp.bfloat16)
        out_spec = pl.BlockSpec((tm, tn), lambda i, j: (i, j))

    out = pl.pallas_call(
        kernel,
        out_shape=out_shape,
        grid_spec=pltpu.PrefetchScalarGridSpec(
            num_scalar_prefetch=0,
            grid=grid,
            in_specs=[
                pl.BlockSpec((tm, K), lambda i, j: (i, 0)),
                pl.BlockSpec((K, tn), lambda i, j: (0, j)),
                pl.BlockSpec((1, tn), lambda i, j: (0, j)),
            ],
            out_specs=out_spec,
        ),
        compiler_params=pltpu.CompilerParams(
            dimension_semantics=("parallel", "parallel"),
            vmem_limit_bytes=32 * 1024 * 1024),
    )(patches, w2d, b2d)

    if emit_train:
        # (T, M, C_out) -> (N, C_out, Ho, Wo, T)  (PyTorch layout, once per stage)
        out = out[:, :M, :].reshape(T, N, Ho, Wo, C_out)
        return out.transpose(1, 4, 2, 3, 0)
    # Inner block: only the T-mean of the spikes is ever consumed downstream.
    return out[:M].reshape(N, Ho, Wo, C_out)


# ---------------------------------------------------------------------------
# RepVGGplusStage forward: chain of blocks, first with `stride`, rest stride 1
# ---------------------------------------------------------------------------
def repvgg_plus_stage_forward(x, params, stride):
    # x: (N, C_in, H, W, T) spike train, PyTorch layout
    assert x.shape[-1] == T_REDUCE, "kernel assumes input time dim == T_reduce"
    # Hoisted T-mean + one transpose to channels-last; all blocks stay channels-last.
    xm = jnp.mean(x.astype(jnp.float32), axis=-1).transpose(0, 2, 3, 1)   # (N, H, W, C)
    strides = [stride] + [1] * (len(params) - 1)
    out = None
    for idx, ((w, b), s) in enumerate(zip(params, strides)):
        last = idx == len(params) - 1
        out = repvgg_block_forward(xm, w, b, s, emit_train=last)
        if not last:
            xm = out                                   # (N, Ho, Wo, C_out) bf16 spike-mean
    # Spikes are exactly 0/1; cast back to f32 to preserve the module's output dtype.
    return out.astype(jnp.float32)


# ---------------------------------------------------------------------------
# Pure-JAX reference (no Pallas) for a sanity check
# ---------------------------------------------------------------------------
def _block_ref(x, weight, bias, stride):
    x_mean = jnp.mean(x, axis=-1)                                     # (N, C, H, W)
    y = jax.lax.conv_general_dilated(
        x_mean, weight, (stride, stride), [(1, 1), (1, 1)],
        dimension_numbers=('NCHW', 'OIHW', 'NCHW'),
        precision=jax.lax.Precision.HIGHEST)
    y = y + bias[None, :, None, None]
    theta = jnp.float32(THETA)
    spikes = [(jnp.mod(jnp.float32(i) * y, theta) + y >= theta).astype(jnp.float32)
              for i in range(T_REDUCE)]
    return jnp.stack(spikes, axis=-1)                                 # (N, C_out, Ho, Wo, T)


def _stage_ref(x, params, stride):
    strides = [stride] + [1] * (len(params) - 1)
    for (w, b), s in zip(params, strides):
        x = _block_ref(x, w, b, s)
    return x


if __name__ == "__main__":
    key = jax.random.PRNGKey(0)
    # Small shapes: batch=2, in_planes=4, planes=8, spatial=16, num_blocks=2, stride=2
    N, C_in, H, W = 2, 4, 16, 16
    planes, num_blocks, stride = 8, 2, 2
    T = T_REDUCE

    k_x, k_w0, k_b0, k_w1, k_b1 = jax.random.split(key, 5)
    # Input spike train (binary spikes, as an SNN stage would receive)
    x = jax.random.bernoulli(k_x, 0.5, (N, C_in, H, W, T)).astype(jnp.float32)

    # Deterministic synthetic deploy-mode parameters. Weights are stored at bf16
    # precision (the kernel's MXU dtype) so the f32 reference and the bf16 kernel use
    # bit-identical weight values; spike means k/8 and spikes 0/1 are bf16-exact too.
    def _bf16_round(a):
        return a.astype(jnp.bfloat16).astype(jnp.float32)

    params = [
        (_bf16_round(jax.random.normal(k_w0, (planes, C_in, 3, 3), jnp.float32) * 0.4),
         jax.random.normal(k_b0, (planes,), jnp.float32) * 0.5 + 1.0),
        (_bf16_round(jax.random.normal(k_w1, (planes, planes, 3, 3), jnp.float32) * 0.4),
         jax.random.normal(k_b1, (planes,), jnp.float32) * 0.5 + 1.0),
    ]

    out = repvgg_plus_stage_forward(x, params, stride)
    out = jax.block_until_ready(out)

    # Sanity check vs. pure-JAX reference (spikes are 0/1; allow a tiny fraction of
    # threshold-boundary flips from differing float accumulation orders).
    ref = jax.block_until_ready(_stage_ref(x, params, stride))
    assert out.shape == ref.shape == (N, planes, H // stride, W // stride, T)
    mismatch = jnp.mean((jnp.abs(out - ref) > 0.5).astype(jnp.float32))
    assert float(mismatch) < 0.01, f"spike mismatch fraction too high: {float(mismatch)}"

    print("KERNEL_OK")
</pallas_src>

<mosaic_0001>
module attributes {stable_mosaic.version = 11 : i64} {
  func.func @_repvgg_block_kernel(%arg0: i32, %arg1: i32, %arg2: memref<128x36xbf16, #tpu.memory_space<vmem>>, %arg3: memref<36x8xbf16, #tpu.memory_space<vmem>>, %arg4: memref<1x8xf32, #tpu.memory_space<vmem>>, %arg5: memref<128x8xbf16, #tpu.memory_space<vmem>>) attributes {dimension_semantics = [#tpu.dimension_semantics<parallel>, #tpu.dimension_semantics<parallel>], iteration_bounds = array<i64: 1, 1>, scalar_prefetch = 0 : i64, scratch_operands = 0 : i64, tpu.core_type = #tpu.core_type<tc>, window_params = [{transform_indices = @transform_0, window_bounds = array<i64: 128, 36>}, {transform_indices = @transform_1, window_bounds = array<i64: 36, 8>}, {transform_indices = @transform_2, window_bounds = array<i64: 1, 8>}, {transform_indices = @transform_3, window_bounds = array<i64: 128, 8>}]} {
    %c0 = arith.constant 0 : index
    %c0_0 = arith.constant 0 : index
    %0 = vector.load %arg2[%c0, %c0_0] : memref<128x36xbf16, #tpu.memory_space<vmem>>, vector<128x36xbf16>
    %c0_1 = arith.constant 0 : index
    %c0_2 = arith.constant 0 : index
    %1 = vector.load %arg3[%c0_1, %c0_2] : memref<36x8xbf16, #tpu.memory_space<vmem>>, vector<36x8xbf16>
    %cst = arith.constant dense<0.000000e+00> : vector<128x8xf32>
    %2 = tpu.matmul %0, %1, %cst {dimension_numbers = #tpu.dot_dimension_numbers<[1], [0], [0], [1], [0, 0, 1, 1], [], []>} : vector<128x36xbf16>, vector<36x8xbf16>, vector<128x8xf32> -> vector<128x8xf32>
    %c0_3 = arith.constant 0 : index
    %c0_4 = arith.constant 0 : index
    %3 = vector.load %arg4[%c0_3, %c0_4] : memref<1x8xf32, #tpu.memory_space<vmem>>, vector<1x8xf32>
    %4 = vector.broadcast %3 : vector<1x8xf32> to vector<128x8xf32>
    %5 = arith.addf %2, %4 : vector<128x8xf32>
    %cst_5 = arith.constant 0.000000e+00 : f32
    %6 = vector.broadcast %cst_5 : f32 to vector<128x8xf32>
    %cst_6 = arith.constant 0.000000e+00 : f32
    %7 = vector.broadcast %cst_6 : f32 to vector<128x8xf32>
    %8 = arith.mulf %7, %5 : vector<128x8xf32>
    %cst_7 = arith.constant 0.500250101 : f32
    %9 = vector.broadcast %cst_7 : f32 to vector<128x8xf32>
    %10 = arith.mulf %8, %9 : vector<128x8xf32>
    %11 = math.floor %10 : vector<128x8xf32>
    %cst_8 = arith.constant 1.999000e+00 : f32
    %12 = vector.broadcast %cst_8 : f32 to vector<128x8xf32>
    %13 = arith.mulf %11, %12 : vector<128x8xf32>
    %14 = arith.subf %8, %13 : vector<128x8xf32>
    %15 = arith.addf %14, %5 : vector<128x8xf32>
    %cst_9 = arith.constant 1.999000e+00 : f32
    %16 = vector.broadcast %cst_9 : f32 to vector<128x8xf32>
    %17 = arith.cmpf oge, %15, %16 : vector<128x8xf32>
    %18 = arith.extui %17 : vector<128x8xi1> to vector<128x8xi32>
    %19 = arith.sitofp %18 : vector<128x8xi32> to vector<128x8xf32>
    %20 = arith.addf %6, %19 : vector<128x8xf32>
    %cst_10 = arith.constant 1.000000e+00 : f32
    %21 = vector.broadcast %cst_10 : f32 to vector<128x8xf32>
    %22 = arith.mulf %21, %5 : vector<128x8xf32>
    %cst_11 = arith.constant 0.500250101 : f32
    %23 = vector.broadcast %cst_11 : f32 to vector<128x8xf32>
    %24 = arith.mulf %22, %23 : vector<128x8xf32>
    %25 = math.floor %24 : vector<128x8xf32>
    %cst_12 = arith.constant 1.999000e+00 : f32
    %26 = vector.broadcast %cst_12 : f32 to vector<128x8xf32>
    %27 = arith.mulf %25, %26 : vector<128x8xf32>
    %28 = arith.subf %22, %27 : vector<128x8xf32>
    %29 = arith.addf %28, %5 : vector<128x8xf32>
    %cst_13 = arith.constant 1.999000e+00 : f32
    %30 = vector.broadcast %cst_13 : f32 to vector<128x8xf32>
    %31 = arith.cmpf oge, %29, %30 : vector<128x8xf32>
    %32 = arith.extui %31 : vector<128x8xi1> to vector<128x8xi32>
    %33 = arith.sitofp %32 : vector<128x8xi32> to vector<128x8xf32>
    %34 = arith.addf %20, %33 : vector<128x8xf32>
    %cst_14 = arith.constant 2.000000e+00 : f32
    %35 = vector.broadcast %cst_14 : f32 to vector<128x8xf32>
    %36 = arith.mulf %35, %5 : vector<128x8xf32>
    %cst_15 = arith.constant 0.500250101 : f32
    %37 = vector.broadcast %cst_15 : f32 to vector<128x8xf32>
    %38 = arith.mulf %36, %37 : vector<128x8xf32>
    %39 = math.floor %38 : vector<128x8xf32>
    %cst_16 = arith.constant 1.999000e+00 : f32
    %40 = vector.broadcast %cst_16 : f32 to vector<128x8xf32>
    %41 = arith.mulf %39, %40 : vector<128x8xf32>
    %42 = arith.subf %36, %41 : vector<128x8xf32>
    %43 = arith.addf %42, %5 : vector<128x8xf32>
    %cst_17 = arith.constant 1.999000e+00 : f32
    %44 = vector.broadcast %cst_17 : f32 to vector<128x8xf32>
    %45 = arith.cmpf oge, %43, %44 : vector<128x8xf32>
    %46 = arith.extui %45 : vector<128x8xi1> to vector<128x8xi32>
    %47 = arith.sitofp %46 : vector<128x8xi32> to vector<128x8xf32>
    %48 = arith.addf %34, %47 : vector<128x8xf32>
    %cst_18 = arith.constant 3.000000e+00 : f32
    %49 = vector.broadcast %cst_18 : f32 to vector<128x8xf32>
    %50 = arith.mulf %49, %5 : vector<128x8xf32>
    %cst_19 = arith.constant 0.500250101 : f32
    %51 = vector.broadcast %cst_19 : f32 to vector<128x8xf32>
    %52 = arith.mulf %50, %51 : vector<128x8xf32>
    %53 = math.floor %52 : vector<128x8xf32>
    %cst_20 = arith.constant 1.999000e+00 : f32
    %54 = vector.broadcast %cst_20 : f32 to vector<128x8xf32>
    %55 = arith.mulf %53, %54 : vector<128x8xf32>
    %56 = arith.subf %50, %55 : vector<128x8xf32>
    %57 = arith.addf %56, %5 : vector<128x8xf32>
    %cst_21 = arith.constant 1.999000e+00 : f32
    %58 = vector.broadcast %cst_21 : f32 to vector<128x8xf32>
    %59 = arith.cmpf oge, %57, %58 : vector<128x8xf32>
    %60 = arith.extui %59 : vector<128x8xi1> to vector<128x8xi32>
    %61 = arith.sitofp %60 : vector<128x8xi32> to vector<128x8xf32>
    %62 = arith.addf %48, %61 : vector<128x8xf32>
    %cst_22 = arith.constant 4.000000e+00 : f32
    %63 = vector.broadcast %cst_22 : f32 to vector<128x8xf32>
    %64 = arith.mulf %63, %5 : vector<128x8xf32>
    %cst_23 = arith.constant 0.500250101 : f32
    %65 = vector.broadcast %cst_23 : f32 to vector<128x8xf32>
    %66 = arith.mulf %64, %65 : vector<128x8xf32>
    %67 = math.floor %66 : vector<128x8xf32>
    %cst_24 = arith.constant 1.999000e+00 : f32
    %68 = vector.broadcast %cst_24 : f32 to vector<128x8xf32>
    %69 = arith.mulf %67, %68 : vector<128x8xf32>
    %70 = arith.subf %64, %69 : vector<128x8xf32>
    %71 = arith.addf %70, %5 : vector<128x8xf32>
    %cst_25 = arith.constant 1.999000e+00 : f32
    %72 = vector.broadcast %cst_25 : f32 to vector<128x8xf32>
    %73 = arith.cmpf oge, %71, %72 : vector<128x8xf32>
    %74 = arith.extui %73 : vector<128x8xi1> to vector<128x8xi32>
    %75 = arith.sitofp %74 : vector<128x8xi32> to vector<128x8xf32>
    %76 = arith.addf %62, %75 : vector<128x8xf32>
    %cst_26 = arith.constant 5.000000e+00 : f32
    %77 = vector.broadcast %cst_26 : f32 to vector<128x8xf32>
    %78 = arith.mulf %77, %5 : vector<128x8xf32>
    %cst_27 = arith.constant 0.500250101 : f32
    %79 = vector.broadcast %cst_27 : f32 to vector<128x8xf32>
    %80 = arith.mulf %78, %79 : vector<128x8xf32>
    %81 = math.floor %80 : vector<128x8xf32>
    %cst_28 = arith.constant 1.999000e+00 : f32
    %82 = vector.broadcast %cst_28 : f32 to vector<128x8xf32>
    %83 = arith.mulf %81, %82 : vector<128x8xf32>
    %84 = arith.subf %78, %83 : vector<128x8xf32>
    %85 = arith.addf %84, %5 : vector<128x8xf32>
    %cst_29 = arith.constant 1.999000e+00 : f32
    %86 = vector.broadcast %cst_29 : f32 to vector<128x8xf32>
    %87 = arith.cmpf oge, %85, %86 : vector<128x8xf32>
    %88 = arith.extui %87 : vector<128x8xi1> to vector<128x8xi32>
    %89 = arith.sitofp %88 : vector<128x8xi32> to vector<128x8xf32>
    %90 = arith.addf %76, %89 : vector<128x8xf32>
    %cst_30 = arith.constant 6.000000e+00 : f32
    %91 = vector.broadcast %cst_30 : f32 to vector<128x8xf32>
    %92 = arith.mulf %91, %5 : vector<128x8xf32>
    %cst_31 = arith.constant 0.500250101 : f32
    %93 = vector.broadcast %cst_31 : f32 to vector<128x8xf32>
    %94 = arith.mulf %92, %93 : vector<128x8xf32>
    %95 = math.floor %94 : vector<128x8xf32>
    %cst_32 = arith.constant 1.999000e+00 : f32
    %96 = vector.broadcast %cst_32 : f32 to vector<128x8xf32>
    %97 = arith.mulf %95, %96 : vector<128x8xf32>
    %98 = arith.subf %92, %97 : vector<128x8xf32>
    %99 = arith.addf %98, %5 : vector<128x8xf32>
    %cst_33 = arith.constant 1.999000e+00 : f32
    %100 = vector.broadcast %cst_33 : f32 to vector<128x8xf32>
    %101 = arith.cmpf oge, %99, %100 : vector<128x8xf32>
    %102 = arith.extui %101 : vector<128x8xi1> to vector<128x8xi32>
    %103 = arith.sitofp %102 : vector<128x8xi32> to vector<128x8xf32>
    %104 = arith.addf %90, %103 : vector<128x8xf32>
    %cst_34 = arith.constant 7.000000e+00 : f32
    %105 = vector.broadcast %cst_34 : f32 to vector<128x8xf32>
    %106 = arith.mulf %105, %5 : vector<128x8xf32>
    %cst_35 = arith.constant 0.500250101 : f32
    %107 = vector.broadcast %cst_35 : f32 to vector<128x8xf32>
    %108 = arith.mulf %106, %107 : vector<128x8xf32>
    %109 = math.floor %108 : vector<128x8xf32>
    %cst_36 = arith.constant 1.999000e+00 : f32
    %110 = vector.broadcast %cst_36 : f32 to vector<128x8xf32>
    %111 = arith.mulf %109, %110 : vector<128x8xf32>
    %112 = arith.subf %106, %111 : vector<128x8xf32>
    %113 = arith.addf %112, %5 : vector<128x8xf32>
    %cst_37 = arith.constant 1.999000e+00 : f32
    %114 = vector.broadcast %cst_37 : f32 to vector<128x8xf32>
    %115 = arith.cmpf oge, %113, %114 : vector<128x8xf32>
    %116 = arith.extui %115 : vector<128x8xi1> to vector<128x8xi32>
    %117 = arith.sitofp %116 : vector<128x8xi32> to vector<128x8xf32>
    %118 = arith.addf %104, %117 : vector<128x8xf32>
    %cst_38 = arith.constant 1.250000e-01 : f32
    %119 = vector.broadcast %cst_38 : f32 to vector<128x8xf32>
    %120 = arith.mulf %118, %119 : vector<128x8xf32>
    %121 = arith.truncf %120 : vector<128x8xf32> to vector<128x8xbf16>
    %c0_39 = arith.constant 0 : index
    %c0_40 = arith.constant 0 : index
    %122 = vector.load %arg5[%c0_39, %c0_40] : memref<128x8xbf16, #tpu.memory_space<vmem>>, vector<128x8xbf16>
    tpu.vector_store %arg5[%c0_39, %c0_40], %121 {strides = array<i32>} : memref<128x8xbf16, #tpu.memory_space<vmem>>, vector<128x8xbf16>,
    return
  }
  func.func @transform_0(%arg0: i32, %arg1: i32) -> (i32, i32) {
    %c0_i32 = arith.constant 0 : i32
    %c0_i32_0 = arith.constant 0 : i32
    return %arg0, %c0_i32 : i32, i32
  }
  func.func @transform_1(%arg0: i32, %arg1: i32) -> (i32, i32) {
    %c0_i32 = arith.constant 0 : i32
    %c0_i32_0 = arith.constant 0 : i32
    return %c0_i32, %arg1 : i32, i32
  }
  func.func @transform_2(%arg0: i32, %arg1: i32) -> (i32, i32) {
    %c0_i32 = arith.constant 0 : i32
    %c0_i32_0 = arith.constant 0 : i32
    return %c0_i32, %arg1 : i32, i32
  }
  func.func @transform_3(%arg0: i32, %arg1: i32) -> (i32, i32) {
    %c0_i32 = arith.constant 0 : i32
    return %arg0, %arg1 : i32, i32
  }
}

</mosaic_0001>

<llo_original>
// kernel: tpu_custom_call.1
$region0: #{tpu_custom_call.1}
  #allocation0 [shape = 'u32[]', space=smem, size = 0x4, offset = 0x4, fixed_abs, tag = 'smem constant byte address 0x4 - core index']
  #allocation1 [shape = 'u32[72,128]{1,0:T(1,128)}', space=vmem, size = 0x9000, scoped, tag = 'internal scratch']
  %s0 = inlined_call_operand.vmem [shape: bf16[128,36], index: 0, kind: input, shape index: {}]
  %s1 = inlined_call_operand.vmem [shape: bf16[36,8], index: 1, kind: input, shape index: {}]
  %s2 = inlined_call_operand.vmem [shape: f32[1,8], index: 2, kind: input, shape index: {}]
  %s3 = inlined_call_operand.vmem [shape: bf16[128,8], index: 3, kind: output, shape index: {}]
  %s4 = sld [smem:[#allocation0]]
  $region22: #{tpu_custom_call.1} parent=0
    _
  %s6 = ssub.s32 1, %s4
  %s7 = scalar_select 0, %s6, %s4
  // Predicated region
  $region2: #{tpu_custom_call.1} parent=0 // pred_check
    _
  $region3: #{tpu_custom_call.1} parent=0 // pred_check_branch
    %9 = sbr.rel (0) target = $region5
  $region4: #{tpu_custom_call.1} parent=0 // pred_region
    _
  $region5: #{tpu_custom_call.1} parent=0 // pred_fallthru
    _
  // Predicated region
  $region6: #{tpu_custom_call.1} parent=0 // pred_check
    _
  $region7: #{tpu_custom_call.1} parent=0 // pred_check_branch
    %11 = sbr.rel (0) target = $region9
  $region8: #{tpu_custom_call.1} parent=0 // pred_region
    _
  $region9: #{tpu_custom_call.1} parent=0 // pred_fallthru
    _
  // Predicated region
  $region10: #{tpu_custom_call.1} parent=0 // pred_check
    _
  $region11: #{tpu_custom_call.1} parent=0 // pred_check_branch
    %13 = sbr.rel (0) target = $region13
  $region12: #{tpu_custom_call.1} parent=0 // pred_region
    _
  $region13: #{tpu_custom_call.1} parent=0 // pred_fallthru
    _
  %v15 = vld [vmem:[%s0] sm:$0xf]
  %v16 = vld [vmem:[%s0 + $0x4] sm:$0xf]
  %v17 = vld [vmem:[%s0 + $0x8] sm:$0xf]
  %v18 = vld [vmem:[%s0 + $0xc] sm:$0xf]
  %v19 = vld [vmem:[%s0 + $0x10] sm:$0xf]
  %v20 = vld [vmem:[%s0 + $0x14] sm:$0xf]
  %v21 = vld [vmem:[%s0 + $0x18] sm:$0xf]
  %v22 = vld [vmem:[%s0 + $0x1c] sm:$0xf]
  %v23 = vld [vmem:[%s0 + $0x20] sm:$0xf]
  %v24 = vld [vmem:[%s0 + $0x24] sm:$0xf]
  %v25 = vld [vmem:[%s0 + $0x28] sm:$0xf]
  %v26 = vld [vmem:[%s0 + $0x2c] sm:$0xf]
  %v27 = vld [vmem:[%s0 + $0x30] sm:$0xf]
  %v28 = vld [vmem:[%s0 + $0x34] sm:$0xf]
  %v29 = vld [vmem:[%s0 + $0x38] sm:$0xf]
  %v30 = vld [vmem:[%s0 + $0x3c] sm:$0xf]
  %v31 = vld [vmem:[%s1] sm:$0xf]
  %v32 = vld [vmem:[%s1 + $0x4] sm:$0xf]
  %v33 = vld [vmem:[%s1 + $0x8] sm:$0xf]
  %v34 = vld [vmem:[%s1 + $0xc] sm:$0xf]
  %v35 = vld [vmem:[%s1 + $0x10] sm:$0x3]
  %v36 = vld [vmem:[%s2] sm:$0x1]
  %v38 = vperm.slane %v36, 0
  %v56 = vunpack.c.l.b16 %v15
  %v57 = vunpack.c.l.b16 %v16
  %v58 = vunpack.c.l.b16 %v17
  %v59 = vunpack.c.l.b16 %v18
  %v60 = vunpack.c.l.b16 %v19
  %v61 = vunpack.c.l.b16 %v20
  %v62 = vunpack.c.l.b16 %v21
  %v63 = vunpack.c.l.b16 %v22
  %v64 = vunpack.c.l.b16 %v23
  %v65 = vunpack.c.l.b16 %v24
  %v66 = vunpack.c.l.b16 %v25
  %v67 = vunpack.c.l.b16 %v26
  %v68 = vunpack.c.l.b16 %v27
  %v69 = vunpack.c.l.b16 %v28
  %v70 = vunpack.c.l.b16 %v29
  %v71 = vunpack.c.l.b16 %v30
  %v72 = vpack.c.b16 %v57, %v56
  %v73 = vpack.c.b16 %v59, %v58
  %v74 = vpack.c.b16 %v61, %v60
  %v75 = vpack.c.b16 %v63, %v62
  %v76 = vpack.c.b16 %v65, %v64
  %v77 = vpack.c.b16 %v67, %v66
  %v78 = vpack.c.b16 %v69, %v68
  %v79 = vpack.c.b16 %v71, %v70
  %v85 = vunpack.c.l.b16 %v31
  %v86 = vunpack.c.l.b16 %v32
  %v87 = vunpack.c.l.b16 %v33
  %v88 = vunpack.c.l.b16 %v34
  %v89 = vunpack.c.l.b16 %v35
  %v90 = vpack.c.b16 %v86, %v85
  %v91 = vpack.c.b16 %v88, %v87
  %v92 = vpack.c.b16 %v89, %v89
  %vm95 = vcmask 293888
  %v97 = vsel %vm95, %v72, 0
  %v100 = vsel %vm95, %v73, 0
  %v103 = vsel %vm95, %v74, 0
  %v106 = vsel %vm95, %v75, 0
  %v109 = vsel %vm95, %v76, 0
  %v112 = vsel %vm95, %v77, 0
  %v115 = vsel %vm95, %v78, 0
  %v118 = vsel %vm95, %v79, 0
  %vm120 = vcmask 1041408
  %v122 = vsel %vm120, %v92, 0
  %124 = vmatpush.bf16.msra.mxu0 0
  %125 = vmatpush.bf16.msra.mxu0 0
  %126 = vmatpush.bf16.msra.mxu0 0
  %127 = vmatpush.bf16.msra.mxu0 0
  %128 = vmatpush.bf16.msra.mxu0 0
  %129 = vmatpush.bf16.msra.mxu0 %v122
  %130 = vmatpush.bf16.msra.mxu0 %v91
  %131 = vmatpush.bf16.msra.mxu0 %v90
  %132 = vmatmul.bf16.gmra.mxu0 %v97
  %v133 = vpop.f32.mrf.mxu0
  %v134 = vadd.f32 %v38, %v133
  %v135 = vpop.f32.mrf.mxu0
  %v136 = vadd.f32 %v38, %v135
  %137 = vmatmul.bf16.gmra.mxu0 %v100
  %v138 = vpop.f32.mrf.mxu0
  %v139 = vadd.f32 %v38, %v138
  %v140 = vpop.f32.mrf.mxu0
  %v141 = vadd.f32 %v38, %v140
  %142 = vmatmul.bf16.gmra.mxu0 %v103
  %v143 = vpop.f32.mrf.mxu0
  %v144 = vadd.f32 %v38, %v143
  %v145 = vpop.f32.mrf.mxu0
  %v146 = vadd.f32 %v38, %v145
  %147 = vmatmul.bf16.gmra.mxu0 %v106
  %v148 = vpop.f32.mrf.mxu0
  %v149 = vadd.f32 %v38, %v148
  %v150 = vpop.f32.mrf.mxu0
  %v151 = vadd.f32 %v38, %v150
  %152 = vmatmul.bf16.gmra.mxu0 %v109
  %v153 = vpop.f32.mrf.mxu0
  %v154 = vadd.f32 %v38, %v153
  %v155 = vpop.f32.mrf.mxu0
  %v156 = vadd.f32 %v38, %v155
  %157 = vmatmul.bf16.gmra.mxu0 %v112
  %v158 = vpop.f32.mrf.mxu0
  %v159 = vadd.f32 %v38, %v158
  %v160 = vpop.f32.mrf.mxu0
  %v161 = vadd.f32 %v38, %v160
  %162 = vmatmul.bf16.gmra.mxu0 %v115
  %v163 = vpop.f32.mrf.mxu0
  %v164 = vadd.f32 %v38, %v163
  %v165 = vpop.f32.mrf.mxu0
  %v166 = vadd.f32 %v38, %v165
  %167 = vmatmul.bf16.gmra.mxu0 %v118
  %v168 = vpop.f32.mrf.mxu0
  %v169 = vadd.f32 %v38, %v168
  %v170 = vpop.f32.mrf.mxu0
  %v171 = vadd.f32 %v38, %v170
  %172 = vdwg.mxu0
  %v173 = vmul.f32 %v134, 0.0
  %v174 = vmul.f32 %v136, 0.0
  %v175 = vmul.f32 %v139, 0.0
  %v176 = vmul.f32 %v141, 0.0
  %v177 = vmul.f32 %v144, 0.0
  %v178 = vmul.f32 %v146, 0.0
  %v179 = vmul.f32 %v149, 0.0
  %v180 = vmul.f32 %v151, 0.0
  %v181 = vmul.f32 %v154, 0.0
  %v182 = vmul.f32 %v156, 0.0
  %v183 = vmul.f32 %v159, 0.0
  %v184 = vmul.f32 %v161, 0.0
  %v185 = vmul.f32 %v164, 0.0
  %v186 = vmul.f32 %v166, 0.0
  %v187 = vmul.f32 %v169, 0.0
  %v188 = vmul.f32 %v171, 0.0
  %v189 = vmul.f32 %v173, 0.5002501
  %v190 = vmul.f32 %v174, 0.5002501
  %v191 = vmul.f32 %v175, 0.5002501
  %v192 = vmul.f32 %v176, 0.5002501
  %v193 = vmul.f32 %v177, 0.5002501
  %v194 = vmul.f32 %v178, 0.5002501
  %v195 = vmul.f32 %v179, 0.5002501
  %v196 = vmul.f32 %v180, 0.5002501
  %v197 = vmul.f32 %v181, 0.5002501
  %v198 = vmul.f32 %v182, 0.5002501
  %v199 = vmul.f32 %v183, 0.5002501
  %v200 = vmul.f32 %v184, 0.5002501
  %v201 = vmul.f32 %v185, 0.5002501
  %v202 = vmul.f32 %v186, 0.5002501
  %v203 = vmul.f32 %v187, 0.5002501
  %v204 = vmul.f32 %v188, 0.5002501
  %v205 = vfloor.f32 %v189
  %v206 = vfloor.f32 %v190
  %v207 = vfloor.f32 %v191
  %v208 = vfloor.f32 %v192
  %v209 = vfloor.f32 %v193
  %v210 = vfloor.f32 %v194
  %v211 = vfloor.f32 %v195
  %v212 = vfloor.f32 %v196
  %v213 = vfloor.f32 %v197
  %v214 = vfloor.f32 %v198
  %v215 = vfloor.f32 %v199
  %v216 = vfloor.f32 %v200
  %v217 = vfloor.f32 %v201
  %v218 = vfloor.f32 %v202
  %v219 = vfloor.f32 %v203
  %v220 = vfloor.f32 %v204
  %v221 = vmul.f32 %v205, 1.999
  %v222 = vmul.f32 %v206, 1.999
  %v223 = vmul.f32 %v207, 1.999
  %v224 = vmul.f32 %v208, 1.999
  %v225 = vmul.f32 %v209, 1.999
  %v226 = vmul.f32 %v210, 1.999
  %v227 = vmul.f32 %v211, 1.999
  %v228 = vmul.f32 %v212, 1.999
  %v229 = vmul.f32 %v213, 1.999
  %v230 = vmul.f32 %v214, 1.999
  %v231 = vmul.f32 %v215, 1.999
  %v232 = vmul.f32 %v216, 1.999
  %v233 = vmul.f32 %v217, 1.999
  %v234 = vmul.f32 %v218, 1.999
  %v235 = vmul.f32 %v219, 1.999
  %v236 = vmul.f32 %v220, 1.999
  %v237 = vsub.f32 %v173, %v221
  %v238 = vsub.f32 %v174, %v222
  %v239 = vsub.f32 %v175, %v223
  %v240 = vsub.f32 %v176, %v224
  %v241 = vsub.f32 %v177, %v225
  %v242 = vsub.f32 %v178, %v226
  %v243 = vsub.f32 %v179, %v227
  %v244 = vsub.f32 %v180, %v228
  %v245 = vsub.f32 %v181, %v229
  %v246 = vsub.f32 %v182, %v230
  %v247 = vsub.f32 %v183, %v231
  %v248 = vsub.f32 %v184, %v232
  %v249 = vsub.f32 %v185, %v233
  %v250 = vsub.f32 %v186, %v234
  %v251 = vsub.f32 %v187, %v235
  %v252 = vsub.f32 %v188, %v236
  %v253 = vadd.f32 %v237, %v134
  %v254 = vadd.f32 %v238, %v136
  %v255 = vadd.f32 %v239, %v139
  %v256 = vadd.f32 %v240, %v141
  %v257 = vadd.f32 %v241, %v144
  %v258 = vadd.f32 %v242, %v146
  %v259 = vadd.f32 %v243, %v149
  %v260 = vadd.f32 %v244, %v151
  %v261 = vadd.f32 %v245, %v154
  %v262 = vadd.f32 %v246, %v156
  %v263 = vadd.f32 %v247, %v159
  %v264 = vadd.f32 %v248, %v161
  %v265 = vadd.f32 %v249, %v164
  %v266 = vadd.f32 %v250, %v166
  %v267 = vadd.f32 %v251, %v169
  %v268 = vadd.f32 %v252, %v171
  %vm269 = vcmp.ge.f32.partialorder %v253, 1.999
  %vm270 = vcmp.ge.f32.partialorder %v254, 1.999
  %vm271 = vcmp.ge.f32.partialorder %v255, 1.999
  %vm272 = vcmp.ge.f32.partialorder %v256, 1.999
  %vm273 = vcmp.ge.f32.partialorder %v257, 1.999
  %vm274 = vcmp.ge.f32.partialorder %v258, 1.999
  %vm275 = vcmp.ge.f32.partialorder %v259, 1.999
  %vm276 = vcmp.ge.f32.partialorder %v260, 1.999
  %vm277 = vcmp.ge.f32.partialorder %v261, 1.999
  %vm278 = vcmp.ge.f32.partialorder %v262, 1.999
  %vm279 = vcmp.ge.f32.partialorder %v263, 1.999
  %vm280 = vcmp.ge.f32.partialorder %v264, 1.999
  %vm281 = vcmp.ge.f32.partialorder %v265, 1.999
  %vm282 = vcmp.ge.f32.partialorder %v266, 1.999
  %vm283 = vcmp.ge.f32.partialorder %v267, 1.999
  %vm284 = vcmp.ge.f32.partialorder %v268, 1.999
  %v285 = vsel %vm269, 1, 0
  %v286 = vsel %vm270, 1, 0
  %v287 = vsel %vm271, 1, 0
  %v288 = vsel %vm272, 1, 0
  %v289 = vsel %vm273, 1, 0
  %v290 = vsel %vm274, 1, 0
  %v291 = vsel %vm275, 1, 0
  %v292 = vsel %vm276, 1, 0
  %v293 = vsel %vm277, 1, 0
  %v294 = vsel %vm278, 1, 0
  %v295 = vsel %vm279, 1, 0
  %v296 = vsel %vm280, 1, 0
  %v297 = vsel %vm281, 1, 0
  %v298 = vsel %vm282, 1, 0
  %v299 = vsel %vm283, 1, 0
  %v300 = vsel %vm284, 1, 0
  %v301 = vcvt.s32.f32 %v285
  %v302 = vcvt.s32.f32 %v286
  %v303 = vcvt.s32.f32 %v287
  %v304 = vcvt.s32.f32 %v288
  %v305 = vcvt.s32.f32 %v289
  %v306 = vcvt.s32.f32 %v290
  %v307 = vcvt.s32.f32 %v291
  %v308 = vcvt.s32.f32 %v292
  %v309 = vcvt.s32.f32 %v293
  %v310 = vcvt.s32.f32 %v294
  %v311 = vcvt.s32.f32 %v295
  %v312 = vcvt.s32.f32 %v296
  %v313 = vcvt.s32.f32 %v297
  %v314 = vcvt.s32.f32 %v298
  %v315 = vcvt.s32.f32 %v299
  %v316 = vcvt.s32.f32 %v300
  %v317 = vadd.f32 %v301, 0.0
  %v318 = vadd.f32 %v302, 0.0
  %v319 = vadd.f32 %v303, 0.0
  %v320 = vadd.f32 %v304, 0.0
  %v321 = vadd.f32 %v305, 0.0
  %v322 = vadd.f32 %v306, 0.0
  %v323 = vadd.f32 %v307, 0.0
  %v324 = vadd.f32 %v308, 0.0
  %v325 = vadd.f32 %v309, 0.0
  %v326 = vadd.f32 %v310, 0.0
  %v327 = vadd.f32 %v311, 0.0
  %v328 = vadd.f32 %v312, 0.0
  %v329 = vadd.f32 %v313, 0.0
  %v330 = vadd.f32 %v314, 0.0
  %v331 = vadd.f32 %v315, 0.0
  %v332 = vadd.f32 %v316, 0.0
  %v333 = vmul.f32 %v134, 0.5002501
  %v334 = vmul.f32 %v136, 0.5002501
  %v335 = vmul.f32 %v139, 0.5002501
  %v336 = vmul.f32 %v141, 0.5002501
  %v337 = vmul.f32 %v144, 0.5002501
  %v338 = vmul.f32 %v146, 0.5002501
  %v339 = vmul.f32 %v149, 0.5002501
  %v340 = vmul.f32 %v151, 0.5002501
  %v341 = vmul.f32 %v154, 0.5002501
  %v342 = vmul.f32 %v156, 0.5002501
  %v343 = vmul.f32 %v159, 0.5002501
  %v344 = vmul.f32 %v161, 0.5002501
  %v345 = vmul.f32 %v164, 0.5002501
  %v346 = vmul.f32 %v166, 0.5002501
  %v347 = vmul.f32 %v169, 0.5002501
  %v348 = vmul.f32 %v171, 0.5002501
  %v349 = vfloor.f32 %v333
  %v350 = vfloor.f32 %v334
  %v351 = vfloor.f32 %v335
  %v352 = vfloor.f32 %v336
  %v353 = vfloor.f32 %v337
  %v354 = vfloor.f32 %v338
  %v355 = vfloor.f32 %v339
  %v356 = vfloor.f32 %v340
  %v357 = vfloor.f32 %v341
  %v358 = vfloor.f32 %v342
  %v359 = vfloor.f32 %v343
  %v360 = vfloor.f32 %v344
  %v361 = vfloor.f32 %v345
  %v362 = vfloor.f32 %v346
  %v363 = vfloor.f32 %v347
  %v364 = vfloor.f32 %v348
  %v365 = vmul.f32 %v349, 1.999
  %v366 = vmul.f32 %v350, 1.999
  %v367 = vmul.f32 %v351, 1.999
  %v368 = vmul.f32 %v352, 1.999
  %v369 = vmul.f32 %v353, 1.999
  %v370 = vmul.f32 %v354, 1.999
  %v371 = vmul.f32 %v355, 1.999
  %v372 = vmul.f32 %v356, 1.999
  %v373 = vmul.f32 %v357, 1.999
  %v374 = vmul.f32 %v358, 1.999
  %v375 = vmul.f32 %v359, 1.999
  %v376 = vmul.f32 %v360, 1.999
  %v377 = vmul.f32 %v361, 1.999
  %v378 = vmul.f32 %v362, 1.999
  %v379 = vmul.f32 %v363, 1.999
  %v380 = vmul.f32 %v364, 1.999
  %v381 = vsub.f32 %v134, %v365
  %v382 = vsub.f32 %v136, %v366
  %v383 = vsub.f32 %v139, %v367
  %v384 = vsub.f32 %v141, %v368
  %v385 = vsub.f32 %v144, %v369
  %v386 = vsub.f32 %v146, %v370
  %v387 = vsub.f32 %v149, %v371
  %v388 = vsub.f32 %v151, %v372
  %v389 = vsub.f32 %v154, %v373
  %v390 = vsub.f32 %v156, %v374
  %v391 = vsub.f32 %v159, %v375
  %v392 = vsub.f32 %v161, %v376
  %v393 = vsub.f32 %v164, %v377
  %v394 = vsub.f32 %v166, %v378
  %v395 = vsub.f32 %v169, %v379
  %v396 = vsub.f32 %v171, %v380
  %v397 = vadd.f32 %v381, %v134
  %v398 = vadd.f32 %v382, %v136
  %v399 = vadd.f32 %v383, %v139
  %v400 = vadd.f32 %v384, %v141
  %v401 = vadd.f32 %v385, %v144
  %v402 = vadd.f32 %v386, %v146
  %v403 = vadd.f32 %v387, %v149
  %v404 = vadd.f32 %v388, %v151
  %v405 = vadd.f32 %v389, %v154
  %v406 = vadd.f32 %v390, %v156
  %v407 = vadd.f32 %v391, %v159
  %v408 = vadd.f32 %v392, %v161
  %v409 = vadd.f32 %v393, %v164
  %v410 = vadd.f32 %v394, %v166
  %v411 = vadd.f32 %v395, %v169
  %v412 = vadd.f32 %v396, %v171
  %vm413 = vcmp.ge.f32.partialorder %v397, 1.999
  %vm414 = vcmp.ge.f32.partialorder %v398, 1.999
  %vm415 = vcmp.ge.f32.partialorder %v399, 1.999
  %vm416 = vcmp.ge.f32.partialorder %v400, 1.999
  %vm417 = vcmp.ge.f32.partialorder %v401, 1.999
  %vm418 = vcmp.ge.f32.partialorder %v402, 1.999
  %vm419 = vcmp.ge.f32.partialorder %v403, 1.999
  %vm420 = vcmp.ge.f32.partialorder %v404, 1.999
  %vm421 = vcmp.ge.f32.partialorder %v405, 1.999
  %vm422 = vcmp.ge.f32.partialorder %v406, 1.999
  %vm423 = vcmp.ge.f32.partialorder %v407, 1.999
  %vm424 = vcmp.ge.f32.partialorder %v408, 1.999
  %vm425 = vcmp.ge.f32.partialorder %v409, 1.999
  %vm426 = vcmp.ge.f32.partialorder %v410, 1.999
  %vm427 = vcmp.ge.f32.partialorder %v411, 1.999
  %vm428 = vcmp.ge.f32.partialorder %v412, 1.999
  %v429 = vsel %vm413, 1, 0
  %v430 = vsel %vm414, 1, 0
  %v431 = vsel %vm415, 1, 0
  %v432 = vsel %vm416, 1, 0
  %v433 = vsel %vm417, 1, 0
  %v434 = vsel %vm418, 1, 0
  %v435 = vsel %vm419, 1, 0
  %v436 = vsel %vm420, 1, 0
  %v437 = vsel %vm421, 1, 0
  %v438 = vsel %vm422, 1, 0
  %v439 = vsel %vm423, 1, 0
  %v440 = vsel %vm424, 1, 0
  %v441 = vsel %vm425, 1, 0
  %v442 = vsel %vm426, 1, 0
  %v443 = vsel %vm427, 1, 0
  %v444 = vsel %vm428, 1, 0
  %v445 = vcvt.s32.f32 %v429
  %v446 = vcvt.s32.f32 %v430
  %v447 = vcvt.s32.f32 %v431
  %v448 = vcvt.s32.f32 %v432
  %v449 = vcvt.s32.f32 %v433
  %v450 = vcvt.s32.f32 %v434
  %v451 = vcvt.s32.f32 %v435
  %v452 = vcvt.s32.f32 %v436
  %v453 = vcvt.s32.f32 %v437
  %v454 = vcvt.s32.f32 %v438
  %v455 = vcvt.s32.f32 %v439
  %v456 = vcvt.s32.f32 %v440
  %v457 = vcvt.s32.f32 %v441
  %v458 = vcvt.s32.f32 %v442
  %v459 = vcvt.s32.f32 %v443
  %v460 = vcvt.s32.f32 %v444
  %v461 = vadd.f32 %v317, %v445
  %v462 = vadd.f32 %v318, %v446
  %v463 = vadd.f32 %v319, %v447
  %v464 = vadd.f32 %v320, %v448
  %v465 = vadd.f32 %v321, %v449
  %v466 = vadd.f32 %v322, %v450
  %v467 = vadd.f32 %v323, %v451
  %v468 = vadd.f32 %v324, %v452
  %v469 = vadd.f32 %v325, %v453
  %v470 = vadd.f32 %v326, %v454
  %v471 = vadd.f32 %v327, %v455
  %v472 = vadd.f32 %v328, %v456
  %v473 = vadd.f32 %v329, %v457
  %v474 = vadd.f32 %v330, %v458
  %v475 = vadd.f32 %v331, %v459
  %v476 = vadd.f32 %v332, %v460
  %v477 = vmul.f32 %v134, 2.0
  %v478 = vmul.f32 %v136, 2.0
  %v479 = vmul.f32 %v139, 2.0
  %v480 = vmul.f32 %v141, 2.0
  %v481 = vmul.f32 %v144, 2.0
  %v482 = vmul.f32 %v146, 2.0
  %v483 = vmul.f32 %v149, 2.0
  %v484 = vmul.f32 %v151, 2.0
  %v485 = vmul.f32 %v154, 2.0
  %v486 = vmul.f32 %v156, 2.0
  %v487 = vmul.f32 %v159, 2.0
  %v488 = vmul.f32 %v161, 2.0
  %v489 = vmul.f32 %v164, 2.0
  %v490 = vmul.f32 %v166, 2.0
  %v491 = vmul.f32 %v169, 2.0
  %v492 = vmul.f32 %v171, 2.0
  %v493 = vmul.f32 %v477, 0.5002501
  %v494 = vmul.f32 %v478, 0.5002501
  %v495 = vmul.f32 %v479, 0.5002501
  %v496 = vmul.f32 %v480, 0.5002501
  %v497 = vmul.f32 %v481, 0.5002501
  %v498 = vmul.f32 %v482, 0.5002501
  %v499 = vmul.f32 %v483, 0.5002501
  %v500 = vmul.f32 %v484, 0.5002501
  %v501 = vmul.f32 %v485, 0.5002501
  %v502 = vmul.f32 %v486, 0.5002501
  %v503 = vmul.f32 %v487, 0.5002501
  %v504 = vmul.f32 %v488, 0.5002501
  %v505 = vmul.f32 %v489, 0.5002501
  %v506 = vmul.f32 %v490, 0.5002501
  %v507 = vmul.f32 %v491, 0.5002501
  %v508 = vmul.f32 %v492, 0.5002501
  %v509 = vfloor.f32 %v493
  %v510 = vfloor.f32 %v494
  %v511 = vfloor.f32 %v495
  %v512 = vfloor.f32 %v496
  %v513 = vfloor.f32 %v497
  %v514 = vfloor.f32 %v498
  %v515 = vfloor.f32 %v499
  %v516 = vfloor.f32 %v500
  %v517 = vfloor.f32 %v501
  %v518 = vfloor.f32 %v502
  %v519 = vfloor.f32 %v503
  %v520 = vfloor.f32 %v504
  %v521 = vfloor.f32 %v505
  %v522 = vfloor.f32 %v506
  %v523 = vfloor.f32 %v507
  %v524 = vfloor.f32 %v508
  %v525 = vmul.f32 %v509, 1.999
  %v526 = vmul.f32 %v510, 1.999
  %v527 = vmul.f32 %v511, 1.999
  %v528 = vmul.f32 %v512, 1.999
  %v529 = vmul.f32 %v513, 1.999
  %v530 = vmul.f32 %v514, 1.999
  %v531 = vmul.f32 %v515, 1.999
  %v532 = vmul.f32 %v516, 1.999
  %v533 = vmul.f32 %v517, 1.999
  %v534 = vmul.f32 %v518, 1.999
  %v535 = vmul.f32 %v519, 1.999
  %v536 = vmul.f32 %v520, 1.999
  %v537 = vmul.f32 %v521, 1.999
  %v538 = vmul.f32 %v522, 1.999
  %v539 = vmul.f32 %v523, 1.999
  %v540 = vmul.f32 %v524, 1.999
  %v541 = vsub.f32 %v477, %v525
  %v542 = vsub.f32 %v478, %v526
  %v543 = vsub.f32 %v479, %v527
  %v544 = vsub.f32 %v480, %v528
  %v545 = vsub.f32 %v481, %v529
  %v546 = vsub.f32 %v482, %v530
  %v547 = vsub.f32 %v483, %v531
  %v548 = vsub.f32 %v484, %v532
  %v549 = vsub.f32 %v485, %v533
  %v550 = vsub.f32 %v486, %v534
  %v551 = vsub.f32 %v487, %v535
  %v552 = vsub.f32 %v488, %v536
  %v553 = vsub.f32 %v489, %v537
  %v554 = vsub.f32 %v490, %v538
  %v555 = vsub.f32 %v491, %v539
  %v556 = vsub.f32 %v492, %v540
  %v557 = vadd.f32 %v541, %v134
  %v558 = vadd.f32 %v542, %v136
  %v559 = vadd.f32 %v543, %v139
  %v560 = vadd.f32 %v544, %v141
  %v561 = vadd.f32 %v545, %v144
  %v562 = vadd.f32 %v546, %v146
  %v563 = vadd.f32 %v547, %v149
  %v564 = vadd.f32 %v548, %v151
  %v565 = vadd.f32 %v549, %v154
  %v566 = vadd.f32 %v550, %v156
  %v567 = vadd.f32 %v551, %v159
  %v568 = vadd.f32 %v552, %v161
  %v569 = vadd.f32 %v553, %v164
  %v570 = vadd.f32 %v554, %v166
  %v571 = vadd.f32 %v555, %v169
  %v572 = vadd.f32 %v556, %v171
  %vm573 = vcmp.ge.f32.partialorder %v557, 1.999
  %vm574 = vcmp.ge.f32.partialorder %v558, 1.999
  %vm575 = vcmp.ge.f32.partialorder %v559, 1.999
  %vm576 = vcmp.ge.f32.partialorder %v560, 1.999
  %vm577 = vcmp.ge.f32.partialorder %v561, 1.999
  %vm578 = vcmp.ge.f32.partialorder %v562, 1.999
  %vm579 = vcmp.ge.f32.partialorder %v563, 1.999
  %vm580 = vcmp.ge.f32.partialorder %v564, 1.999
  %vm581 = vcmp.ge.f32.partialorder %v565, 1.999
  %vm582 = vcmp.ge.f32.partialorder %v566, 1.999
  %vm583 = vcmp.ge.f32.partialorder %v567, 1.999
  %vm584 = vcmp.ge.f32.partialorder %v568, 1.999
  %vm585 = vcmp.ge.f32.partialorder %v569, 1.999
  %vm586 = vcmp.ge.f32.partialorder %v570, 1.999
  %vm587 = vcmp.ge.f32.partialorder %v571, 1.999
  %vm588 = vcmp.ge.f32.partialorder %v572, 1.999
  %v589 = vsel %vm573, 1, 0
  %v590 = vsel %vm574, 1, 0
  %v591 = vsel %vm575, 1, 0
  %v592 = vsel %vm576, 1, 0
  %v593 = vsel %vm577, 1, 0
  %v594 = vsel %vm578, 1, 0
  %v595 = vsel %vm579, 1, 0
  %v596 = vsel %vm580, 1, 0
  %v597 = vsel %vm581, 1, 0
  %v598 = vsel %vm582, 1, 0
  %v599 = vsel %vm583, 1, 0
  %v600 = vsel %vm584, 1, 0
  %v601 = vsel %vm585, 1, 0
  %v602 = vsel %vm586, 1, 0
  %v603 = vsel %vm587, 1, 0
  %v604 = vsel %vm588, 1, 0
  %v605 = vcvt.s32.f32 %v589
  %v606 = vcvt.s32.f32 %v590
  %v607 = vcvt.s32.f32 %v591
  %v608 = vcvt.s32.f32 %v592
  %v609 = vcvt.s32.f32 %v593
  %v610 = vcvt.s32.f32 %v594
  %v611 = vcvt.s32.f32 %v595
  %v612 = vcvt.s32.f32 %v596
  %v613 = vcvt.s32.f32 %v597
  %v614 = vcvt.s32.f32 %v598
  %v615 = vcvt.s32.f32 %v599
  %v616 = vcvt.s32.f32 %v600
  %v617 = vcvt.s32.f32 %v601
  %v618 = vcvt.s32.f32 %v602
  %v619 = vcvt.s32.f32 %v603
  %v620 = vcvt.s32.f32 %v604
  %v621 = vadd.f32 %v461, %v605
  %v622 = vadd.f32 %v462, %v606
  %v623 = vadd.f32 %v463, %v607
  %v624 = vadd.f32 %v464, %v608
  %v625 = vadd.f32 %v465, %v609
  %v626 = vadd.f32 %v466, %v610
  %v627 = vadd.f32 %v467, %v611
  %v628 = vadd.f32 %v468, %v612
  %v629 = vadd.f32 %v469, %v613
  %v630 = vadd.f32 %v470, %v614
  %v631 = vadd.f32 %v471, %v615
  %v632 = vadd.f32 %v472, %v616
  %v633 = vadd.f32 %v473, %v617
  %v634 = vadd.f32 %v474, %v618
  %v635 = vadd.f32 %v475, %v619
  %v636 = vadd.f32 %v476, %v620
  %v637 = vmul.f32 %v134, 3.0
  %v638 = vmul.f32 %v136, 3.0
  %v639 = vmul.f32 %v139, 3.0
  %v640 = vmul.f32 %v141, 3.0
  %v641 = vmul.f32 %v144, 3.0
  %v642 = vmul.f32 %v146, 3.0
  %v643 = vmul.f32 %v149, 3.0
  %v644 = vmul.f32 %v151, 3.0
  %v645 = vmul.f32 %v154, 3.0
  %v646 = vmul.f32 %v156, 3.0
  %v647 = vmul.f32 %v159, 3.0
  %v648 = vmul.f32 %v161, 3.0
  %v649 = vmul.f32 %v164, 3.0
  %v650 = vmul.f32 %v166, 3.0
  %v651 = vmul.f32 %v169, 3.0
  %v652 = vmul.f32 %v171, 3.0
  %v653 = vmul.f32 %v637, 0.5002501
  %v654 = vmul.f32 %v638, 0.5002501
  %v655 = vmul.f32 %v639, 0.5002501
  %v656 = vmul.f32 %v640, 0.5002501
  %v657 = vmul.f32 %v641, 0.5002501
  %v658 = vmul.f32 %v642, 0.5002501
  %v659 = vmul.f32 %v643, 0.5002501
  %v660 = vmul.f32 %v644, 0.5002501
  %v661 = vmul.f32 %v645, 0.5002501
  %v662 = vmul.f32 %v646, 0.5002501
  %v663 = vmul.f32 %v647, 0.5002501
  %v664 = vmul.f32 %v648, 0.5002501
  %v665 = vmul.f32 %v649, 0.5002501
  %v666 = vmul.f32 %v650, 0.5002501
  %v667 = vmul.f32 %v651, 0.5002501
  %v668 = vmul.f32 %v652, 0.5002501
  %v669 = vfloor.f32 %v653
  %v670 = vfloor.f32 %v654
  %v671 = vfloor.f32 %v655
  %v672 = vfloor.f32 %v656
  %v673 = vfloor.f32 %v657
  %v674 = vfloor.f32 %v658
  %v675 = vfloor.f32 %v659
  %v676 = vfloor.f32 %v660
  %v677 = vfloor.f32 %v661
  %v678 = vfloor.f32 %v662
  %v679 = vfloor.f32 %v663
  %v680 = vfloor.f32 %v664
  %v681 = vfloor.f32 %v665
  %v682 = vfloor.f32 %v666
  %v683 = vfloor.f32 %v667
  %v684 = vfloor.f32 %v668
  %v685 = vmul.f32 %v669, 1.999
  %v686 = vmul.f32 %v670, 1.999
  %v687 = vmul.f32 %v671, 1.999
  %v688 = vmul.f32 %v672, 1.999
  %v689 = vmul.f32 %v673, 1.999
  %v690 = vmul.f32 %v674, 1.999
  %v691 = vmul.f32 %v675, 1.999
  %v692 = vmul.f32 %v676, 1.999
  %v693 = vmul.f32 %v677, 1.999
  %v694 = vmul.f32 %v678, 1.999
  %v695 = vmul.f32 %v679, 1.999
  %v696 = vmul.f32 %v680, 1.999
  %v697 = vmul.f32 %v681, 1.999
  %v698 = vmul.f32 %v682, 1.999
  %v699 = vmul.f32 %v683, 1.999
  %v700 = vmul.f32 %v684, 1.999
  %v701 = vsub.f32 %v637, %v685
  %v702 = vsub.f32 %v638, %v686
  %v703 = vsub.f32 %v639, %v687
  %v704 = vsub.f32 %v640, %v688
  %v705 = vsub.f32 %v641, %v689
  %v706 = vsub.f32 %v642, %v690
  %v707 = vsub.f32 %v643, %v691
  %v708 = vsub.f32 %v644, %v692
  %v709 = vsub.f32 %v645, %v693
  %v710 = vsub.f32 %v646, %v694
  %v711 = vsub.f32 %v647, %v695
  %v712 = vsub.f32 %v648, %v696
  %v713 = vsub.f32 %v649, %v697
  %v714 = vsub.f32 %v650, %v698
  %v715 = vsub.f32 %v651, %v699
  %v716 = vsub.f32 %v652, %v700
  %v717 = vadd.f32 %v701, %v134
  %v718 = vadd.f32 %v702, %v136
  %v719 = vadd.f32 %v703, %v139
  %v720 = vadd.f32 %v704, %v141
  %v721 = vadd.f32 %v705, %v144
  %v722 = vadd.f32 %v706, %v146
  %v723 = vadd.f32 %v707, %v149
  %v724 = vadd.f32 %v708, %v151
  %v725 = vadd.f32 %v709, %v154
  %v726 = vadd.f32 %v710, %v156
  %v727 = vadd.f32 %v711, %v159
  %v728 = vadd.f32 %v712, %v161
  %v729 = vadd.f32 %v713, %v164
  %v730 = vadd.f32 %v714, %v166
  %v731 = vadd.f32 %v715, %v169
  %v732 = vadd.f32 %v716, %v171
  %vm733 = vcmp.ge.f32.partialorder %v717, 1.999
  %vm734 = vcmp.ge.f32.partialorder %v718, 1.999
  %vm735 = vcmp.ge.f32.partialorder %v719, 1.999
  %vm736 = vcmp.ge.f32.partialorder %v720, 1.999
  %vm737 = vcmp.ge.f32.partialorder %v721, 1.999
  %vm738 = vcmp.ge.f32.partialorder %v722, 1.999
  %vm739 = vcmp.ge.f32.partialorder %v723, 1.999
  %vm740 = vcmp.ge.f32.partialorder %v724, 1.999
  %vm741 = vcmp.ge.f32.partialorder %v725, 1.999
  %vm742 = vcmp.ge.f32.partialorder %v726, 1.999
  %vm743 = vcmp.ge.f32.partialorder %v727, 1.999
  %vm744 = vcmp.ge.f32.partialorder %v728, 1.999
  %vm745 = vcmp.ge.f32.partialorder %v729, 1.999
  %vm746 = vcmp.ge.f32.partialorder %v730, 1.999
  %vm747 = vcmp.ge.f32.partialorder %v731, 1.999
  %vm748 = vcmp.ge.f32.partialorder %v732, 1.999
  %v749 = vsel %vm733, 1, 0
  %v750 = vsel %vm734, 1, 0
  %v751 = vsel %vm735, 1, 0
  %v752 = vsel %vm736, 1, 0
  %v753 = vsel %vm737, 1, 0
  %v754 = vsel %vm738, 1, 0
  %v755 = vsel %vm739, 1, 0
  %v756 = vsel %vm740, 1, 0
  %v757 = vsel %vm741, 1, 0
  %v758 = vsel %vm742, 1, 0
  %v759 = vsel %vm743, 1, 0
  %v760 = vsel %vm744, 1, 0
  %v761 = vsel %vm745, 1, 0
  %v762 = vsel %vm746, 1, 0
  %v763 = vsel %vm747, 1, 0
  %v764 = vsel %vm748, 1, 0
  %v765 = vcvt.s32.f32 %v749
  %v766 = vcvt.s32.f32 %v750
  %v767 = vcvt.s32.f32 %v751
  %v768 = vcvt.s32.f32 %v752
  %v769 = vcvt.s32.f32 %v753
  %v770 = vcvt.s32.f32 %v754
  %v771 = vcvt.s32.f32 %v755
  %v772 = vcvt.s32.f32 %v756
  %v773 = vcvt.s32.f32 %v757
  %v774 = vcvt.s32.f32 %v758
  %v775 = vcvt.s32.f32 %v759
  %v776 = vcvt.s32.f32 %v760
  %v777 = vcvt.s32.f32 %v761
  %v778 = vcvt.s32.f32 %v762
  %v779 = vcvt.s32.f32 %v763
  %v780 = vcvt.s32.f32 %v764
  %v781 = vadd.f32 %v621, %v765
  %v782 = vadd.f32 %v622, %v766
  %v783 = vadd.f32 %v623, %v767
  %v784 = vadd.f32 %v624, %v768
  %v785 = vadd.f32 %v625, %v769
  %v786 = vadd.f32 %v626, %v770
  %v787 = vadd.f32 %v627, %v771
  %v788 = vadd.f32 %v628, %v772
  %v789 = vadd.f32 %v629, %v773
  %v790 = vadd.f32 %v630, %v774
  %v791 = vadd.f32 %v631, %v775
  %v792 = vadd.f32 %v632, %v776
  %v793 = vadd.f32 %v633, %v777
  %v794 = vadd.f32 %v634, %v778
  %v795 = vadd.f32 %v635, %v779
  %v796 = vadd.f32 %v636, %v780
  %v797 = vmul.f32 %v134, 4.0
  %v798 = vmul.f32 %v136, 4.0
  %v799 = vmul.f32 %v139, 4.0
  %v800 = vmul.f32 %v141, 4.0
  %v801 = vmul.f32 %v144, 4.0
  %v802 = vmul.f32 %v146, 4.0
  %v803 = vmul.f32 %v149, 4.0
  %v804 = vmul.f32 %v151, 4.0
  %v805 = vmul.f32 %v154, 4.0
  %v806 = vmul.f32 %v156, 4.0
  %v807 = vmul.f32 %v159, 4.0
  %v808 = vmul.f32 %v161, 4.0
  %v809 = vmul.f32 %v164, 4.0
  %v810 = vmul.f32 %v166, 4.0
  %v811 = vmul.f32 %v169, 4.0
  %v812 = vmul.f32 %v171, 4.0
  %v813 = vmul.f32 %v797, 0.5002501
  %v814 = vmul.f32 %v798, 0.5002501
  %v815 = vmul.f32 %v799, 0.5002501
  %v816 = vmul.f32 %v800, 0.5002501
  %v817 = vmul.f32 %v801, 0.5002501
  %v818 = vmul.f32 %v802, 0.5002501
  %v819 = vmul.f32 %v803, 0.5002501
  %v820 = vmul.f32 %v804, 0.5002501
  %v821 = vmul.f32 %v805, 0.5002501
  %v822 = vmul.f32 %v806, 0.5002501
  %v823 = vmul.f32 %v807, 0.5002501
  %v824 = vmul.f32 %v808, 0.5002501
  %v825 = vmul.f32 %v809, 0.5002501
  %v826 = vmul.f32 %v810, 0.5002501
  %v827 = vmul.f32 %v811, 0.5002501
  %v828 = vmul.f32 %v812, 0.5002501
  %v829 = vfloor.f32 %v813
  %v830 = vfloor.f32 %v814
  %v831 = vfloor.f32 %v815
  %v832 = vfloor.f32 %v816
  %v833 = vfloor.f32 %v817
  %v834 = vfloor.f32 %v818
  %v835 = vfloor.f32 %v819
  %v836 = vfloor.f32 %v820
  %v837 = vfloor.f32 %v821
  %v838 = vfloor.f32 %v822
  %v839 = vfloor.f32 %v823
  %v840 = vfloor.f32 %v824
  %v841 = vfloor.f32 %v825
  %v842 = vfloor.f32 %v826
  %v843 = vfloor.f32 %v827
  %v844 = vfloor.f32 %v828
  %v845 = vmul.f32 %v829, 1.999
  %v846 = vmul.f32 %v830, 1.999
  %v847 = vmul.f32 %v831, 1.999
  %v848 = vmul.f32 %v832, 1.999
  %v849 = vmul.f32 %v833, 1.999
  %v850 = vmul.f32 %v834, 1.999
  %v851 = vmul.f32 %v835, 1.999
  %v852 = vmul.f32 %v836, 1.999
  %v853 = vmul.f32 %v837, 1.999
  %v854 = vmul.f32 %v838, 1.999
  %v855 = vmul.f32 %v839, 1.999
  %v856 = vmul.f32 %v840, 1.999
  %v857 = vmul.f32 %v841, 1.999
  %v858 = vmul.f32 %v842, 1.999
  %v859 = vmul.f32 %v843, 1.999
  %v860 = vmul.f32 %v844, 1.999
  %v861 = vsub.f32 %v797, %v845
  %v862 = vsub.f32 %v798, %v846
  %v863 = vsub.f32 %v799, %v847
  %v864 = vsub.f32 %v800, %v848
  %v865 = vsub.f32 %v801, %v849
  %v866 = vsub.f32 %v802, %v850
  %v867 = vsub.f32 %v803, %v851
  %v868 = vsub.f32 %v804, %v852
  %v869 = vsub.f32 %v805, %v853
  %v870 = vsub.f32 %v806, %v854
  %v871 = vsub.f32 %v807, %v855
  %v872 = vsub.f32 %v808, %v856
  %v873 = vsub.f32 %v809, %v857
  %v874 = vsub.f32 %v810, %v858
  %v875 = vsub.f32 %v811, %v859
  %v876 = vsub.f32 %v812, %v860
  %v877 = vadd.f32 %v861, %v134
  %v878 = vadd.f32 %v862, %v136
  %v879 = vadd.f32 %v863, %v139
  %v880 = vadd.f32 %v864, %v141
  %v881 = vadd.f32 %v865, %v144
  %v882 = vadd.f32 %v866, %v146
  %v883 = vadd.f32 %v867, %v149
  %v884 = vadd.f32 %v868, %v151
  %v885 = vadd.f32 %v869, %v154
  %v886 = vadd.f32 %v870, %v156
  %v887 = vadd.f32 %v871, %v159
  %v888 = vadd.f32 %v872, %v161
  %v889 = vadd.f32 %v873, %v164
  %v890 = vadd.f32 %v874, %v166
  %v891 = vadd.f32 %v875, %v169
  %v892 = vadd.f32 %v876, %v171
  %vm893 = vcmp.ge.f32.partialorder %v877, 1.999
  %vm894 = vcmp.ge.f32.partialorder %v878, 1.999
  %vm895 = vcmp.ge.f32.partialorder %v879, 1.999
  %vm896 = vcmp.ge.f32.partialorder %v880, 1.999
  %vm897 = vcmp.ge.f32.partialorder %v881, 1.999
  %vm898 = vcmp.ge.f32.partialorder %v882, 1.999
  %vm899 = vcmp.ge.f32.partialorder %v883, 1.999
  %vm900 = vcmp.ge.f32.partialorder %v884, 1.999
  %vm901 = vcmp.ge.f32.partialorder %v885, 1.999
  %vm902 = vcmp.ge.f32.partialorder %v886, 1.999
  %vm903 = vcmp.ge.f32.partialorder %v887, 1.999
  %vm904 = vcmp.ge.f32.partialorder %v888, 1.999
  %vm905 = vcmp.ge.f32.partialorder %v889, 1.999
  %vm906 = vcmp.ge.f32.partialorder %v890, 1.999
  %vm907 = vcmp.ge.f32.partialorder %v891, 1.999
  %vm908 = vcmp.ge.f32.partialorder %v892, 1.999
  %v909 = vsel %vm893, 1, 0
  %v910 = vsel %vm894, 1, 0
  %v911 = vsel %vm895, 1, 0
  %v912 = vsel %vm896, 1, 0
  %v913 = vsel %vm897, 1, 0
  %v914 = vsel %vm898, 1, 0
  %v915 = vsel %vm899, 1, 0
  %v916 = vsel %vm900, 1, 0
  %v917 = vsel %vm901, 1, 0
  %v918 = vsel %vm902, 1, 0
  %v919 = vsel %vm903, 1, 0
  %v920 = vsel %vm904, 1, 0
  %v921 = vsel %vm905, 1, 0
  %v922 = vsel %vm906, 1, 0
  %v923 = vsel %vm907, 1, 0
  %v924 = vsel %vm908, 1, 0
  %v925 = vcvt.s32.f32 %v909
  %v926 = vcvt.s32.f32 %v910
  %v927 = vcvt.s32.f32 %v911
  %v928 = vcvt.s32.f32 %v912
  %v929 = vcvt.s32.f32 %v913
  %v930 = vcvt.s32.f32 %v914
  %v931 = vcvt.s32.f32 %v915
  %v932 = vcvt.s32.f32 %v916
  %v933 = vcvt.s32.f32 %v917
  %v934 = vcvt.s32.f32 %v918
  %v935 = vcvt.s32.f32 %v919
  %v936 = vcvt.s32.f32 %v920
  %v937 = vcvt.s32.f32 %v921
  %v938 = vcvt.s32.f32 %v922
  %v939 = vcvt.s32.f32 %v923
  %v940 = vcvt.s32.f32 %v924
  %v941 = vadd.f32 %v781, %v925
  %v942 = vadd.f32 %v782, %v926
  %v943 = vadd.f32 %v783, %v927
  %v944 = vadd.f32 %v784, %v928
  %v945 = vadd.f32 %v785, %v929
  %v946 = vadd.f32 %v786, %v930
  %v947 = vadd.f32 %v787, %v931
  %v948 = vadd.f32 %v788, %v932
  %v949 = vadd.f32 %v789, %v933
  %v950 = vadd.f32 %v790, %v934
  %v951 = vadd.f32 %v791, %v935
  %v952 = vadd.f32 %v792, %v936
  %v953 = vadd.f32 %v793, %v937
  %v954 = vadd.f32 %v794, %v938
  %v955 = vadd.f32 %v795, %v939
  %v956 = vadd.f32 %v796, %v940
  %v957 = vmul.f32 %v134, 5.0
  %v958 = vmul.f32 %v136, 5.0
  %v959 = vmul.f32 %v139, 5.0
  %v960 = vmul.f32 %v141, 5.0
  %v961 = vmul.f32 %v144, 5.0
  %v962 = vmul.f32 %v146, 5.0
  %v963 = vmul.f32 %v149, 5.0
  %v964 = vmul.f32 %v151, 5.0
  %v965 = vmul.f32 %v154, 5.0
  %v966 = vmul.f32 %v156, 5.0
  %v967 = vmul.f32 %v159, 5.0
  %v968 = vmul.f32 %v161, 5.0
  %v969 = vmul.f32 %v164, 5.0
  %v970 = vmul.f32 %v166, 5.0
  %v971 = vmul.f32 %v169, 5.0
  %v972 = vmul.f32 %v171, 5.0
  %v973 = vmul.f32 %v957, 0.5002501
  %v974 = vmul.f32 %v958, 0.5002501
  %v975 = vmul.f32 %v959, 0.5002501
  %v976 = vmul.f32 %v960, 0.5002501
  %v977 = vmul.f32 %v961, 0.5002501
  %v978 = vmul.f32 %v962, 0.5002501
  %v979 = vmul.f32 %v963, 0.5002501
  %v980 = vmul.f32 %v964, 0.5002501
  %v981 = vmul.f32 %v965, 0.5002501
  %v982 = vmul.f32 %v966, 0.5002501
  %v983 = vmul.f32 %v967, 0.5002501
  %v984 = vmul.f32 %v968, 0.5002501
  %v985 = vmul.f32 %v969, 0.5002501
  %v986 = vmul.f32 %v970, 0.5002501
  %v987 = vmul.f32 %v971, 0.5002501
  %v988 = vmul.f32 %v972, 0.5002501
  %v989 = vfloor.f32 %v973
  %v990 = vfloor.f32 %v974
  %v991 = vfloor.f32 %v975
  %v992 = vfloor.f32 %v976
  %v993 = vfloor.f32 %v977
  %v994 = vfloor.f32 %v978
  %v995 = vfloor.f32 %v979
  %v996 = vfloor.f32 %v980
  %v997 = vfloor.f32 %v981
  %v998 = vfloor.f32 %v982
  %v999 = vfloor.f32 %v983
  %v1000 = vfloor.f32 %v984
  %v1001 = vfloor.f32 %v985
  %v1002 = vfloor.f32 %v986
  %v1003 = vfloor.f32 %v987
  %v1004 = vfloor.f32 %v988
  %v1005 = vmul.f32 %v989, 1.999
  %v1006 = vmul.f32 %v990, 1.999
  %v1007 = vmul.f32 %v991, 1.999
  %v1008 = vmul.f32 %v992, 1.999
  %v1009 = vmul.f32 %v993, 1.999
  %v1010 = vmul.f32 %v994, 1.999
  %v1011 = vmul.f32 %v995, 1.999
  %v1012 = vmul.f32 %v996, 1.999
  %v1013 = vmul.f32 %v997, 1.999
  %v1014 = vmul.f32 %v998, 1.999
  %v1015 = vmul.f32 %v999, 1.999
  %v1016 = vmul.f32 %v1000, 1.999
  %v1017 = vmul.f32 %v1001, 1.999
  %v1018 = vmul.f32 %v1002, 1.999
  %v1019 = vmul.f32 %v1003, 1.999
  %v1020 = vmul.f32 %v1004, 1.999
  %v1021 = vsub.f32 %v957, %v1005
  %v1022 = vsub.f32 %v958, %v1006
  %v1023 = vsub.f32 %v959, %v1007
  %v1024 = vsub.f32 %v960, %v1008
  %v1025 = vsub.f32 %v961, %v1009
  %v1026 = vsub.f32 %v962, %v1010
  %v1027 = vsub.f32 %v963, %v1011
  %v1028 = vsub.f32 %v964, %v1012
  %v1029 = vsub.f32 %v965, %v1013
  %v1030 = vsub.f32 %v966, %v1014
  %v1031 = vsub.f32 %v967, %v1015
  %v1032 = vsub.f32 %v968, %v1016
  %v1033 = vsub.f32 %v969, %v1017
  %v1034 = vsub.f32 %v970, %v1018
  %v1035 = vsub.f32 %v971, %v1019
  %v1036 = vsub.f32 %v972, %v1020
  %v1037 = vadd.f32 %v1021, %v134
  %v1038 = vadd.f32 %v1022, %v136
  %v1039 = vadd.f32 %v1023, %v139
  %v1040 = vadd.f32 %v1024, %v141
  %v1041 = vadd.f32 %v1025, %v144
  %v1042 = vadd.f32 %v1026, %v146
  %v1043 = vadd.f32 %v1027, %v149
  %v1044 = vadd.f32 %v1028, %v151
  %v1045 = vadd.f32 %v1029, %v154
  %v1046 = vadd.f32 %v1030, %v156
  %v1047 = vadd.f32 %v1031, %v159
  %v1048 = vadd.f32 %v1032, %v161
  %v1049 = vadd.f32 %v1033, %v164
  %v1050 = vadd.f32 %v1034, %v166
  %v1051 = vadd.f32 %v1035, %v169
  %v1052 = vadd.f32 %v1036, %v171
  %vm1053 = vcmp.ge.f32.partialorder %v1037, 1.999
  %vm1054 = vcmp.ge.f32.partialorder %v1038, 1.999
  %vm1055 = vcmp.ge.f32.partialorder %v1039, 1.999
  %vm1056 = vcmp.ge.f32.partialorder %v1040, 1.999
  %vm1057 = vcmp.ge.f32.partialorder %v1041, 1.999
  %vm1058 = vcmp.ge.f32.partialorder %v1042, 1.999
  %vm1059 = vcmp.ge.f32.partialorder %v1043, 1.999
  %vm1060 = vcmp.ge.f32.partialorder %v1044, 1.999
  %vm1061 = vcmp.ge.f32.partialorder %v1045, 1.999
  %vm1062 = vcmp.ge.f32.partialorder %v1046, 1.999
  %vm1063 = vcmp.ge.f32.partialorder %v1047, 1.999
  %vm1064 = vcmp.ge.f32.partialorder %v1048, 1.999
  %vm1065 = vcmp.ge.f32.partialorder %v1049, 1.999
  %vm1066 = vcmp.ge.f32.partialorder %v1050, 1.999
  %vm1067 = vcmp.ge.f32.partialorder %v1051, 1.999
  %vm1068 = vcmp.ge.f32.partialorder %v1052, 1.999
  %v1069 = vsel %vm1053, 1, 0
  %v1070 = vsel %vm1054, 1, 0
  %v1071 = vsel %vm1055, 1, 0
  %v1072 = vsel %vm1056, 1, 0
  %v1073 = vsel %vm1057, 1, 0
  %v1074 = vsel %vm1058, 1, 0
  %v1075 = vsel %vm1059, 1, 0
  %v1076 = vsel %vm1060, 1, 0
  %v1077 = vsel %vm1061, 1, 0
  %v1078 = vsel %vm1062, 1, 0
  %v1079 = vsel %vm1063, 1, 0
  %v1080 = vsel %vm1064, 1, 0
  %v1081 = vsel %vm1065, 1, 0
  %v1082 = vsel %vm1066, 1, 0
  %v1083 = vsel %vm1067, 1, 0
  %v1084 = vsel %vm1068, 1, 0
  %v1085 = vcvt.s32.f32 %v1069
  %v1086 = vcvt.s32.f32 %v1070
  %v1087 = vcvt.s32.f32 %v1071
  %v1088 = vcvt.s32.f32 %v1072
  %v1089 = vcvt.s32.f32 %v1073
  %v1090 = vcvt.s32.f32 %v1074
  %v1091 = vcvt.s32.f32 %v1075
  %v1092 = vcvt.s32.f32 %v1076
  %v1093 = vcvt.s32.f32 %v1077
  %v1094 = vcvt.s32.f32 %v1078
  %v1095 = vcvt.s32.f32 %v1079
  %v1096 = vcvt.s32.f32 %v1080
  %v1097 = vcvt.s32.f32 %v1081
  %v1098 = vcvt.s32.f32 %v1082
  %v1099 = vcvt.s32.f32 %v1083
  %v1100 = vcvt.s32.f32 %v1084
  %v1101 = vadd.f32 %v941, %v1085
  %v1102 = vadd.f32 %v942, %v1086
  %v1103 = vadd.f32 %v943, %v1087
  %v1104 = vadd.f32 %v944, %v1088
  %v1105 = vadd.f32 %v945, %v1089
  %v1106 = vadd.f32 %v946, %v1090
  %v1107 = vadd.f32 %v947, %v1091
  %v1108 = vadd.f32 %v948, %v1092
  %v1109 = vadd.f32 %v949, %v1093
  %v1110 = vadd.f32 %v950, %v1094
  %v1111 = vadd.f32 %v951, %v1095
  %v1112 = vadd.f32 %v952, %v1096
  %v1113 = vadd.f32 %v953, %v1097
  %v1114 = vadd.f32 %v954, %v1098
  %v1115 = vadd.f32 %v955, %v1099
  %v1116 = vadd.f32 %v956, %v1100
  %v1117 = vmul.f32 %v134, 6.0
  %v1118 = vmul.f32 %v136, 6.0
  %v1119 = vmul.f32 %v139, 6.0
  %v1120 = vmul.f32 %v141, 6.0
  %v1121 = vmul.f32 %v144, 6.0
  %v1122 = vmul.f32 %v146, 6.0
  %v1123 = vmul.f32 %v149, 6.0
  %v1124 = vmul.f32 %v151, 6.0
  %v1125 = vmul.f32 %v154, 6.0
  %v1126 = vmul.f32 %v156, 6.0
  %v1127 = vmul.f32 %v159, 6.0
  %v1128 = vmul.f32 %v161, 6.0
  %v1129 = vmul.f32 %v164, 6.0
  %v1130 = vmul.f32 %v166, 6.0
  %v1131 = vmul.f32 %v169, 6.0
  %v1132 = vmul.f32 %v171, 6.0
  %v1133 = vmul.f32 %v1117, 0.5002501
  %v1134 = vmul.f32 %v1118, 0.5002501
  %v1135 = vmul.f32 %v1119, 0.5002501
  %v1136 = vmul.f32 %v1120, 0.5002501
  %v1137 = vmul.f32 %v1121, 0.5002501
  %v1138 = vmul.f32 %v1122, 0.5002501
  %v1139 = vmul.f32 %v1123, 0.5002501
  %v1140 = vmul.f32 %v1124, 0.5002501
  %v1141 = vmul.f32 %v1125, 0.5002501
  %v1142 = vmul.f32 %v1126, 0.5002501
  %v1143 = vmul.f32 %v1127, 0.5002501
  %v1144 = vmul.f32 %v1128, 0.5002501
  %v1145 = vmul.f32 %v1129, 0.5002501
  %v1146 = vmul.f32 %v1130, 0.5002501
  %v1147 = vmul.f32 %v1131, 0.5002501
  %v1148 = vmul.f32 %v1132, 0.5002501
  %v1149 = vfloor.f32 %v1133
  %v1150 = vfloor.f32 %v1134
  %v1151 = vfloor.f32 %v1135
  %v1152 = vfloor.f32 %v1136
  %v1153 = vfloor.f32 %v1137
  %v1154 = vfloor.f32 %v1138
  %v1155 = vfloor.f32 %v1139
  %v1156 = vfloor.f32 %v1140
  %v1157 = vfloor.f32 %v1141
  %v1158 = vfloor.f32 %v1142
  %v1159 = vfloor.f32 %v1143
  %v1160 = vfloor.f32 %v1144
  %v1161 = vfloor.f32 %v1145
  %v1162 = vfloor.f32 %v1146
  %v1163 = vfloor.f32 %v1147
  %v1164 = vfloor.f32 %v1148
  %v1165 = vmul.f32 %v1149, 1.999
  %v1166 = vmul.f32 %v1150, 1.999
  %v1167 = vmul.f32 %v1151, 1.999
  %v1168 = vmul.f32 %v1152, 1.999
  %v1169 = vmul.f32 %v1153, 1.999
  %v1170 = vmul.f32 %v1154, 1.999
  %v1171 = vmul.f32 %v1155, 1.999
  %v1172 = vmul.f32 %v1156, 1.999
  %v1173 = vmul.f32 %v1157, 1.999
  %v1174 = vmul.f32 %v1158, 1.999
  %v1175 = vmul.f32 %v1159, 1.999
  %v1176 = vmul.f32 %v1160, 1.999
  %v1177 = vmul.f32 %v1161, 1.999
  %v1178 = vmul.f32 %v1162, 1.999
  %v1179 = vmul.f32 %v1163, 1.999
  %v1180 = vmul.f32 %v1164, 1.999
  %v1181 = vsub.f32 %v1117, %v1165
  %v1182 = vsub.f32 %v1118, %v1166
  %v1183 = vsub.f32 %v1119, %v1167
  %v1184 = vsub.f32 %v1120, %v1168
  %v1185 = vsub.f32 %v1121, %v1169
  %v1186 = vsub.f32 %v1122, %v1170
  %v1187 = vsub.f32 %v1123, %v1171
  %v1188 = vsub.f32 %v1124, %v1172
  %v1189 = vsub.f32 %v1125, %v1173
  %v1190 = vsub.f32 %v1126, %v1174
  %v1191 = vsub.f32 %v1127, %v1175
  %v1192 = vsub.f32 %v1128, %v1176
  %v1193 = vsub.f32 %v1129, %v1177
  %v1194 = vsub.f32 %v1130, %v1178
  %v1195 = vsub.f32 %v1131, %v1179
  %v1196 = vsub.f32 %v1132, %v1180
  %v1197 = vadd.f32 %v1181, %v134
  %v1198 = vadd.f32 %v1182, %v136
  %v1199 = vadd.f32 %v1183, %v139
  %v1200 = vadd.f32 %v1184, %v141
  %v1201 = vadd.f32 %v1185, %v144
  %v1202 = vadd.f32 %v1186, %v146
  %v1203 = vadd.f32 %v1187, %v149
  %v1204 = vadd.f32 %v1188, %v151
  %v1205 = vadd.f32 %v1189, %v154
  %v1206 = vadd.f32 %v1190, %v156
  %v1207 = vadd.f32 %v1191, %v159
  %v1208 = vadd.f32 %v1192, %v161
  %v1209 = vadd.f32 %v1193, %v164
  %v1210 = vadd.f32 %v1194, %v166
  %v1211 = vadd.f32 %v1195, %v169
  %v1212 = vadd.f32 %v1196, %v171
  %vm1213 = vcmp.ge.f32.partialorder %v1197, 1.999
  %vm1214 = vcmp.ge.f32.partialorder %v1198, 1.999
  %vm1215 = vcmp.ge.f32.partialorder %v1199, 1.999
  %vm1216 = vcmp.ge.f32.partialorder %v1200, 1.999
  %vm1217 = vcmp.ge.f32.partialorder %v1201, 1.999
  %vm1218 = vcmp.ge.f32.partialorder %v1202, 1.999
  %vm1219 = vcmp.ge.f32.partialorder %v1203, 1.999
  %vm1220 = vcmp.ge.f32.partialorder %v1204, 1.999
  %vm1221 = vcmp.ge.f32.partialorder %v1205, 1.999
  %vm1222 = vcmp.ge.f32.partialorder %v1206, 1.999
  %vm1223 = vcmp.ge.f32.partialorder %v1207, 1.999
  %vm1224 = vcmp.ge.f32.partialorder %v1208, 1.999
  %vm1225 = vcmp.ge.f32.partialorder %v1209, 1.999
  %vm1226 = vcmp.ge.f32.partialorder %v1210, 1.999
  %vm1227 = vcmp.ge.f32.partialorder %v1211, 1.999
  %vm1228 = vcmp.ge.f32.partialorder %v1212, 1.999
  %v1229 = vsel %vm1213, 1, 0
  %v1230 = vsel %vm1214, 1, 0
  %v1231 = vsel %vm1215, 1, 0
  %v1232 = vsel %vm1216, 1, 0
  %v1233 = vsel %vm1217, 1, 0
  %v1234 = vsel %vm1218, 1, 0
  %v1235 = vsel %vm1219, 1, 0
  %v1236 = vsel %vm1220, 1, 0
  %v1237 = vsel %vm1221, 1, 0
  %v1238 = vsel %vm1222, 1, 0
  %v1239 = vsel %vm1223, 1, 0
  %v1240 = vsel %vm1224, 1, 0
  %v1241 = vsel %vm1225, 1, 0
  %v1242 = vsel %vm1226, 1, 0
  %v1243 = vsel %vm1227, 1, 0
  %v1244 = vsel %vm1228, 1, 0
  %v1245 = vcvt.s32.f32 %v1229
  %v1246 = vcvt.s32.f32 %v1230
  %v1247 = vcvt.s32.f32 %v1231
  %v1248 = vcvt.s32.f32 %v1232
  %v1249 = vcvt.s32.f32 %v1233
  %v1250 = vcvt.s32.f32 %v1234
  %v1251 = vcvt.s32.f32 %v1235
  %v1252 = vcvt.s32.f32 %v1236
  %v1253 = vcvt.s32.f32 %v1237
  %v1254 = vcvt.s32.f32 %v1238
  %v1255 = vcvt.s32.f32 %v1239
  %v1256 = vcvt.s32.f32 %v1240
  %v1257 = vcvt.s32.f32 %v1241
  %v1258 = vcvt.s32.f32 %v1242
  %v1259 = vcvt.s32.f32 %v1243
  %v1260 = vcvt.s32.f32 %v1244
  %v1261 = vadd.f32 %v1101, %v1245
  %v1262 = vadd.f32 %v1102, %v1246
  %v1263 = vadd.f32 %v1103, %v1247
  %v1264 = vadd.f32 %v1104, %v1248
  %v1265 = vadd.f32 %v1105, %v1249
  %v1266 = vadd.f32 %v1106, %v1250
  %v1267 = vadd.f32 %v1107, %v1251
  %v1268 = vadd.f32 %v1108, %v1252
  %v1269 = vadd.f32 %v1109, %v1253
  %v1270 = vadd.f32 %v1110, %v1254
  %v1271 = vadd.f32 %v1111, %v1255
  %v1272 = vadd.f32 %v1112, %v1256
  %v1273 = vadd.f32 %v1113, %v1257
  %v1274 = vadd.f32 %v1114, %v1258
  %v1275 = vadd.f32 %v1115, %v1259
  %v1276 = vadd.f32 %v1116, %v1260
  %v1277 = vmul.f32 %v134, 7.0
  %v1278 = vmul.f32 %v136, 7.0
  %v1279 = vmul.f32 %v139, 7.0
  %v1280 = vmul.f32 %v141, 7.0
  %v1281 = vmul.f32 %v144, 7.0
  %v1282 = vmul.f32 %v146, 7.0
  %v1283 = vmul.f32 %v149, 7.0
  %v1284 = vmul.f32 %v151, 7.0
  %v1285 = vmul.f32 %v154, 7.0
  %v1286 = vmul.f32 %v156, 7.0
  %v1287 = vmul.f32 %v159, 7.0
  %v1288 = vmul.f32 %v161, 7.0
  %v1289 = vmul.f32 %v164, 7.0
  %v1290 = vmul.f32 %v166, 7.0
  %v1291 = vmul.f32 %v169, 7.0
  %v1292 = vmul.f32 %v171, 7.0
  %v1293 = vmul.f32 %v1277, 0.5002501
  %v1294 = vmul.f32 %v1278, 0.5002501
  %v1295 = vmul.f32 %v1279, 0.5002501
  %v1296 = vmul.f32 %v1280, 0.5002501
  %v1297 = vmul.f32 %v1281, 0.5002501
  %v1298 = vmul.f32 %v1282, 0.5002501
  %v1299 = vmul.f32 %v1283, 0.5002501
  %v1300 = vmul.f32 %v1284, 0.5002501
  %v1301 = vmul.f32 %v1285, 0.5002501
  %v1302 = vmul.f32 %v1286, 0.5002501
  %v1303 = vmul.f32 %v1287, 0.5002501
  %v1304 = vmul.f32 %v1288, 0.5002501
  %v1305 = vmul.f32 %v1289, 0.5002501
  %v1306 = vmul.f32 %v1290, 0.5002501
  %v1307 = vmul.f32 %v1291, 0.5002501
  %v1308 = vmul.f32 %v1292, 0.5002501
  %v1309 = vfloor.f32 %v1293
  %v1310 = vfloor.f32 %v1294
  %v1311 = vfloor.f32 %v1295
  %v1312 = vfloor.f32 %v1296
  %v1313 = vfloor.f32 %v1297
  %v1314 = vfloor.f32 %v1298
  %v1315 = vfloor.f32 %v1299
  %v1316 = vfloor.f32 %v1300
  %v1317 = vfloor.f32 %v1301
  %v1318 = vfloor.f32 %v1302
  %v1319 = vfloor.f32 %v1303
  %v1320 = vfloor.f32 %v1304
  %v1321 = vfloor.f32 %v1305
  %v1322 = vfloor.f32 %v1306
  %v1323 = vfloor.f32 %v1307
  %v1324 = vfloor.f32 %v1308
  %v1325 = vmul.f32 %v1309, 1.999
  %v1326 = vmul.f32 %v1310, 1.999
  %v1327 = vmul.f32 %v1311, 1.999
  %v1328 = vmul.f32 %v1312, 1.999
  %v1329 = vmul.f32 %v1313, 1.999
  %v1330 = vmul.f32 %v1314, 1.999
  %v1331 = vmul.f32 %v1315, 1.999
  %v1332 = vmul.f32 %v1316, 1.999
  %v1333 = vmul.f32 %v1317, 1.999
  %v1334 = vmul.f32 %v1318, 1.999
  %v1335 = vmul.f32 %v1319, 1.999
  %v1336 = vmul.f32 %v1320, 1.999
  %v1337 = vmul.f32 %v1321, 1.999
  %v1338 = vmul.f32 %v1322, 1.999
  %v1339 = vmul.f32 %v1323, 1.999
  %v1340 = vmul.f32 %v1324, 1.999
  %v1341 = vsub.f32 %v1277, %v1325
  %v1342 = vsub.f32 %v1278, %v1326
  %v1343 = vsub.f32 %v1279, %v1327
  %v1344 = vsub.f32 %v1280, %v1328
  %v1345 = vsub.f32 %v1281, %v1329
  %v1346 = vsub.f32 %v1282, %v1330
  %v1347 = vsub.f32 %v1283, %v1331
  %v1348 = vsub.f32 %v1284, %v1332
  %v1349 = vsub.f32 %v1285, %v1333
  %v1350 = vsub.f32 %v1286, %v1334
  %v1351 = vsub.f32 %v1287, %v1335
  %v1352 = vsub.f32 %v1288, %v1336
  %v1353 = vsub.f32 %v1289, %v1337
  %v1354 = vsub.f32 %v1290, %v1338
  %v1355 = vsub.f32 %v1291, %v1339
  %v1356 = vsub.f32 %v1292, %v1340
  %v1357 = vadd.f32 %v1341, %v134
  %v1358 = vadd.f32 %v1342, %v136
  %v1359 = vadd.f32 %v1343, %v139
  %v1360 = vadd.f32 %v1344, %v141
  %v1361 = vadd.f32 %v1345, %v144
  %v1362 = vadd.f32 %v1346, %v146
  %v1363 = vadd.f32 %v1347, %v149
  %v1364 = vadd.f32 %v1348, %v151
  %v1365 = vadd.f32 %v1349, %v154
  %v1366 = vadd.f32 %v1350, %v156
  %v1367 = vadd.f32 %v1351, %v159
  %v1368 = vadd.f32 %v1352, %v161
  %v1369 = vadd.f32 %v1353, %v164
  %v1370 = vadd.f32 %v1354, %v166
  %v1371 = vadd.f32 %v1355, %v169
  %v1372 = vadd.f32 %v1356, %v171
  %vm1373 = vcmp.ge.f32.partialorder %v1357, 1.999
  %vm1374 = vcmp.ge.f32.partialorder %v1358, 1.999
  %vm1375 = vcmp.ge.f32.partialorder %v1359, 1.999
  %vm1376 = vcmp.ge.f32.partialorder %v1360, 1.999
  %vm1377 = vcmp.ge.f32.partialorder %v1361, 1.999
  %vm1378 = vcmp.ge.f32.partialorder %v1362, 1.999
  %vm1379 = vcmp.ge.f32.partialorder %v1363, 1.999
  %vm1380 = vcmp.ge.f32.partialorder %v1364, 1.999
  %vm1381 = vcmp.ge.f32.partialorder %v1365, 1.999
  %vm1382 = vcmp.ge.f32.partialorder %v1366, 1.999
  %vm1383 = vcmp.ge.f32.partialorder %v1367, 1.999
  %vm1384 = vcmp.ge.f32.partialorder %v1368, 1.999
  %vm1385 = vcmp.ge.f32.partialorder %v1369, 1.999
  %vm1386 = vcmp.ge.f32.partialorder %v1370, 1.999
  %vm1387 = vcmp.ge.f32.partialorder %v1371, 1.999
  %vm1388 = vcmp.ge.f32.partialorder %v1372, 1.999
  %v1389 = vsel %vm1373, 1, 0
  %v1390 = vsel %vm1374, 1, 0
  %v1391 = vsel %vm1375, 1, 0
  %v1392 = vsel %vm1376, 1, 0
  %v1393 = vsel %vm1377, 1, 0
  %v1394 = vsel %vm1378, 1, 0
  %v1395 = vsel %vm1379, 1, 0
  %v1396 = vsel %vm1380, 1, 0
  %v1397 = vsel %vm1381, 1, 0
  %v1398 = vsel %vm1382, 1, 0
  %v1399 = vsel %vm1383, 1, 0
  %v1400 = vsel %vm1384, 1, 0
  %v1401 = vsel %vm1385, 1, 0
  %v1402 = vsel %vm1386, 1, 0
  %v1403 = vsel %vm1387, 1, 0
  %v1404 = vsel %vm1388, 1, 0
  %v1405 = vcvt.s32.f32 %v1389
  %v1406 = vcvt.s32.f32 %v1390
  %v1407 = vcvt.s32.f32 %v1391
  %v1408 = vcvt.s32.f32 %v1392
  %v1409 = vcvt.s32.f32 %v1393
  %v1410 = vcvt.s32.f32 %v1394
  %v1411 = vcvt.s32.f32 %v1395
  %v1412 = vcvt.s32.f32 %v1396
  %v1413 = vcvt.s32.f32 %v1397
  %v1414 = vcvt.s32.f32 %v1398
  %v1415 = vcvt.s32.f32 %v1399
  %v1416 = vcvt.s32.f32 %v1400
  %v1417 = vcvt.s32.f32 %v1401
  %v1418 = vcvt.s32.f32 %v1402
  %v1419 = vcvt.s32.f32 %v1403
  %v1420 = vcvt.s32.f32 %v1404
  %v1421 = vadd.f32 %v1261, %v1405
  %v1422 = vadd.f32 %v1262, %v1406
  %v1423 = vadd.f32 %v1263, %v1407
  %v1424 = vadd.f32 %v1264, %v1408
  %v1425 = vadd.f32 %v1265, %v1409
  %v1426 = vadd.f32 %v1266, %v1410
  %v1427 = vadd.f32 %v1267, %v1411
  %v1428 = vadd.f32 %v1268, %v1412
  %v1429 = vadd.f32 %v1269, %v1413
  %v1430 = vadd.f32 %v1270, %v1414
  %v1431 = vadd.f32 %v1271, %v1415
  %v1432 = vadd.f32 %v1272, %v1416
  %v1433 = vadd.f32 %v1273, %v1417
  %v1434 = vadd.f32 %v1274, %v1418
  %v1435 = vadd.f32 %v1275, %v1419
  %v1436 = vadd.f32 %v1276, %v1420
  %v1437 = vmul.f32 %v1421, 0.125
  %v1438 = vmul.f32 %v1422, 0.125
  %v1439 = vmul.f32 %v1423, 0.125
  %v1440 = vmul.f32 %v1424, 0.125
  %v1441 = vmul.f32 %v1425, 0.125
  %v1442 = vmul.f32 %v1426, 0.125
  %v1443 = vmul.f32 %v1427, 0.125
  %v1444 = vmul.f32 %v1428, 0.125
  %v1445 = vmul.f32 %v1429, 0.125
  %v1446 = vmul.f32 %v1430, 0.125
  %v1447 = vmul.f32 %v1431, 0.125
  %v1448 = vmul.f32 %v1432, 0.125
  %v1449 = vmul.f32 %v1433, 0.125
  %v1450 = vmul.f32 %v1434, 0.125
  %v1451 = vmul.f32 %v1435, 0.125
  %v1452 = vmul.f32 %v1436, 0.125
  %v1453 = vpack.c.bf16 %v1437, %v1437
  %v1454 = vpack.c.bf16 %v1438, %v1438
  %v1455 = vpack.c.bf16 %v1439, %v1439
  %v1456 = vpack.c.bf16 %v1440, %v1440
  %v1457 = vpack.c.bf16 %v1441, %v1441
  %v1458 = vpack.c.bf16 %v1442, %v1442
  %v1459 = vpack.c.bf16 %v1443, %v1443
  %v1460 = vpack.c.bf16 %v1444, %v1444
  %v1461 = vpack.c.bf16 %v1445, %v1445
  %v1462 = vpack.c.bf16 %v1446, %v1446
  %v1463 = vpack.c.bf16 %v1447, %v1447
  %v1464 = vpack.c.bf16 %v1448, %v1448
  %v1465 = vpack.c.bf16 %v1449, %v1449
  %v1466 = vpack.c.bf16 %v1450, %v1450
  %v1467 = vpack.c.bf16 %v1451, %v1451
  %v1468 = vpack.c.bf16 %v1452, %v1452
  %vm1469 = vcmask 60416
  %1470 = vst.msk [vmem:[%s3] sm:$0xf] %vm1469, %v1453
  %1471 = vst.msk [vmem:[%s3 + $0x4] sm:$0xf] %vm1469, %v1454
  %1472 = vst.msk [vmem:[%s3 + $0x8] sm:$0xf] %vm1469, %v1455
  %1473 = vst.msk [vmem:[%s3 + $0xc] sm:$0xf] %vm1469, %v1456
  %1474 = vst.msk [vmem:[%s3 + $0x10] sm:$0xf] %vm1469, %v1457
  %1475 = vst.msk [vmem:[%s3 + $0x14] sm:$0xf] %vm1469, %v1458
  %1476 = vst.msk [vmem:[%s3 + $0x18] sm:$0xf] %vm1469, %v1459
  %1477 = vst.msk [vmem:[%s3 + $0x1c] sm:$0xf] %vm1469, %v1460
  %1478 = vst.msk [vmem:[%s3 + $0x20] sm:$0xf] %vm1469, %v1461
  %1479 = vst.msk [vmem:[%s3 + $0x24] sm:$0xf] %vm1469, %v1462
  %1480 = vst.msk [vmem:[%s3 + $0x28] sm:$0xf] %vm1469, %v1463
  %1481 = vst.msk [vmem:[%s3 + $0x2c] sm:$0xf] %vm1469, %v1464
  %1482 = vst.msk [vmem:[%s3 + $0x30] sm:$0xf] %vm1469, %v1465
  %1483 = vst.msk [vmem:[%s3 + $0x34] sm:$0xf] %vm1469, %v1466
  %1484 = vst.msk [vmem:[%s3 + $0x38] sm:$0xf] %vm1469, %v1467
  %1485 = vst.msk [vmem:[%s3 + $0x3c] sm:$0xf] %vm1469, %v1468
  // Predicated region
  $region14: #{tpu_custom_call.1} parent=0 // pred_check
    _
  $region15: #{tpu_custom_call.1} parent=0 // pred_check_branch
    %1487 = sbr.rel (0) target = $region17
  $region16: #{tpu_custom_call.1} parent=0 // pred_region
    _
  $region17: #{tpu_custom_call.1} parent=0 // pred_fallthru
    _
  // Predicated region
  $region18: #{tpu_custom_call.1} parent=0 // pred_check
    _
  $region19: #{tpu_custom_call.1} parent=0 // pred_check_branch
    %1489 = sbr.rel (0) target = $region21
  $region20: #{tpu_custom_call.1} parent=0 // pred_region
    _
  $region21: #{tpu_custom_call.1} parent=0 // pred_fallthru
    _

</llo_original>
